<compile_context>
chip_gen: v5e
topology: v5e:2x2
jax: 0.10.0
libtpu: 0.0.40
codegen_flags: <defaults>
</compile_context>

<pallas_src>
import jax
import jax.numpy as jnp
from jax.experimental import pallas as pl
from jax.experimental.pallas import tpu as pltpu

_LOG_2PI = 1.8378770664093453  # log(2*pi)


def _stable_softplus(rho):
    # softplus(rho) = log(1 + exp(rho)); stable for |rho| large.
    return jnp.where(rho > 0,
                     rho + jnp.log1p(jnp.exp(-rho)),
                     jnp.log1p(jnp.exp(rho)))


def _bayesian_layer_kernel(x_ref, wmu_ref, wrho_ref, weps_ref,
                           bmu_ref, brho_ref, beps_ref,
                           y_ref, lp_ref, lq_ref):
    k = pl.program_id(1)
    is_first = k == 0
    half_log2pi = jnp.float32(0.5 * _LOG_2PI)

    # ---- sample weight tile from the variational posterior -----------------
    wmu = wmu_ref[...]                      # (to, tk)
    wrho = wrho_ref[...]
    weps = weps_ref[...]
    wsigma = _stable_softplus(wrho)
    w = wmu + wsigma * weps

    n_w = w.shape[0] * w.shape[1]
    # log prior (standard Normal), constant hoisted out of the elementwise sum.
    lp_w = -0.5 * jnp.sum(w * w) - n_w * half_log2pi
    # log variational posterior: (w - mu)/sigma == eps exactly -> no divide.
    lq_w = (-0.5 * jnp.sum(weps * weps)
            - jnp.sum(jnp.log(wsigma))
            - n_w * half_log2pi)

    # ---- sample bias tile (block is (1, to), resident across the k axis) ---
    bmu = bmu_ref[...]                      # (1, to)
    brho = brho_ref[...]
    beps = beps_ref[...]
    bsigma = _stable_softplus(brho)
    b = bmu + bsigma * beps

    n_b = b.shape[0] * b.shape[1]
    lp_b = -0.5 * jnp.sum(b * b) - n_b * half_log2pi
    lq_b = (-0.5 * jnp.sum(beps * beps)
            - jnp.sum(jnp.log(bsigma))
            - n_b * half_log2pi)

    # Bias contributions are counted exactly once per out-tile (at k == 0).
    lp_tile = lp_w + jnp.where(is_first, lp_b, jnp.float32(0.0))
    lq_tile = lq_w + jnp.where(is_first, lq_b, jnp.float32(0.0))

    # One scalar per (8,128) output block (splat); wrapper picks [0,0] per block.
    lp_ref[...] = jnp.broadcast_to(lp_tile, lp_ref.shape)
    lq_ref[...] = jnp.broadcast_to(lq_tile, lq_ref.shape)

    # ---- linear: y += x_tile @ w_tile^T, bias folded into the k==0 init ----
    @pl.when(is_first)
    def _():
        y_ref[...] = jnp.broadcast_to(b, y_ref.shape)

    y_ref[...] += jax.lax.dot_general(
        x_ref[...], w,
        dimension_numbers=(((1,), (1,)), ((), ())),   # contract in-features; no w.T
        preferred_element_type=jnp.float32)


def _pick_tile(dim, want):
    """Largest multiple of 128 that divides `dim` and is <= want, else full dim."""
    if dim <= want or dim % 128 != 0:
        return dim
    t = max(128, (want // 128) * 128)
    while dim % t != 0:
        t -= 128
    return t


def bayesian_layer_forward(x, w_mu, w_rho, eps_w, b_mu, b_rho, eps_b,
                           *, tile_out=256, tile_in=512):
    """Bayesian linear layer. Returns (y, log_prior, log_var_posterior)."""
    batch, in_features = x.shape
    out_features = w_mu.shape[0]

    to = _pick_tile(out_features, tile_out)
    tk = _pick_tile(in_features, tile_in)
    n_i = out_features // to
    n_k = in_features // tk

    # Bias params as (1, out_features) row vectors -> clean 2-D VMEM tiles.
    b_mu2 = b_mu.reshape(1, out_features)
    b_rho2 = b_rho.reshape(1, out_features)
    eps_b2 = eps_b.reshape(1, out_features)

    out_shapes = (
        jax.ShapeDtypeStruct((batch, out_features), jnp.float32),   # y
        jax.ShapeDtypeStruct((n_i * 8, n_k * 128), jnp.float32),    # log-prior partials
        jax.ShapeDtypeStruct((n_i * 8, n_k * 128), jnp.float32),    # log-q partials
    )

    in_specs = [
        pl.BlockSpec((batch, tk), lambda i, k: (0, k)),   # x
        pl.BlockSpec((to, tk), lambda i, k: (i, k)),      # w_mu
        pl.BlockSpec((to, tk), lambda i, k: (i, k)),      # w_rho
        pl.BlockSpec((to, tk), lambda i, k: (i, k)),      # eps_w
        pl.BlockSpec((1, to), lambda i, k: (0, i)),       # b_mu
        pl.BlockSpec((1, to), lambda i, k: (0, i)),       # b_rho
        pl.BlockSpec((1, to), lambda i, k: (0, i)),       # eps_b
    ]
    out_specs = (
        pl.BlockSpec((batch, to), lambda i, k: (0, i)),   # y (accumulated over k)
        pl.BlockSpec((8, 128), lambda i, k: (i, k)),      # lp partial per tile
        pl.BlockSpec((8, 128), lambda i, k: (i, k)),      # lq partial per tile
    )

    y, lp_part, lq_part = pl.pallas_call(
        _bayesian_layer_kernel,
        out_shape=out_shapes,
        grid=(n_i, n_k),
        in_specs=in_specs,
        out_specs=out_specs,
        compiler_params=pltpu.CompilerParams(
            dimension_semantics=("parallel", "arbitrary")),
    )(x, w_mu, w_rho, eps_w, b_mu2, b_rho2, eps_b2)

    # One scalar per grid tile lives at [0, 0] of its (8, 128) block.
    log_prior = jnp.sum(lp_part[::8, ::128])
    log_var_post = jnp.sum(lq_part[::8, ::128])
    return y, log_prior, log_var_post


def _reference(x, w_mu, w_rho, eps_w, b_mu, b_rho, eps_b):
    """Pure-JAX reference written the 'naive' way the PyTorch module computes it."""
    wsigma = jnp.log1p(jnp.exp(w_rho))
    w = w_mu + wsigma * eps_w
    bsigma = jnp.log1p(jnp.exp(b_rho))
    b = b_mu + bsigma * eps_b

    def std_logpdf(v):
        return -0.5 * v * v - 0.5 * _LOG_2PI

    def logpdf(v, mu, sigma):
        z = (v - mu) / sigma
        return -0.5 * z * z - jnp.log(sigma) - 0.5 * _LOG_2PI

    lp = jnp.sum(std_logpdf(w)) + jnp.sum(std_logpdf(b))
    lq = jnp.sum(logpdf(w, w_mu, wsigma)) + jnp.sum(logpdf(b, b_mu, bsigma))
    y = jnp.dot(x, w.T, precision=jax.lax.Precision.HIGHEST) + b
    return y, lp, lq


if __name__ == "__main__":
    key = jax.random.PRNGKey(0)
    batch, in_features, out_features = 8, 256, 256

    (k_x, k_wmu, k_wrho, k_bmu, k_brho, k_ew, k_eb) = jax.random.split(key, 7)

    # Deterministic "parameter initialization" mirroring the module's __init__.
    x = jax.random.normal(k_x, (batch, in_features), dtype=jnp.float32)
    w_mu = jax.random.normal(k_wmu, (out_features, in_features), dtype=jnp.float32)
    w_rho = jax.random.normal(k_wrho, (out_features, in_features), dtype=jnp.float32)
    b_mu = 0.1 * jax.random.normal(k_bmu, (out_features,), dtype=jnp.float32)
    b_rho = jax.random.normal(k_brho, (out_features,), dtype=jnp.float32)

    # Reparameterization noise (sampled in forward() in the PyTorch module).
    eps_w = jax.random.normal(k_ew, (out_features, in_features), dtype=jnp.float32)
    eps_b = jax.random.normal(k_eb, (out_features,), dtype=jnp.float32)

    # Small tiles so the demo actually exercises the 2x2 grid + k-accumulation.
    y, log_prior, log_var_post = bayesian_layer_forward(
        x, w_mu, w_rho, eps_w, b_mu, b_rho, eps_b, tile_out=128, tile_in=128)
    jax.block_until_ready((y, log_prior, log_var_post))

    y_ref, lp_ref_v, lq_ref_v = _reference(x, w_mu, w_rho, eps_w, b_mu, b_rho, eps_b)

    assert jnp.allclose(y, y_ref, rtol=1e-4, atol=1e-3), "linear output mismatch"
    assert jnp.allclose(log_prior, lp_ref_v, rtol=1e-4, atol=1e-1), "log prior mismatch"
    assert jnp.allclose(log_var_post, lq_ref_v, rtol=1e-4, atol=1e-1), "log posterior mismatch"

    print("KERNEL_OK")
</pallas_src>

<mosaic_0001>
module attributes {stable_mosaic.version = 11 : i64} {
  func.func @_bayesian_layer_kernel(%arg0: i32, %arg1: i32, %arg2: memref<8x128xf32, #tpu.memory_space<vmem>>, %arg3: memref<128x128xf32, #tpu.memory_space<vmem>>, %arg4: memref<128x128xf32, #tpu.memory_space<vmem>>, %arg5: memref<128x128xf32, #tpu.memory_space<vmem>>, %arg6: memref<1x128xf32, #tpu.memory_space<vmem>>, %arg7: memref<1x128xf32, #tpu.memory_space<vmem>>, %arg8: memref<1x128xf32, #tpu.memory_space<vmem>>, %arg9: memref<8x128xf32, #tpu.memory_space<vmem>>, %arg10: memref<8x128xf32, #tpu.memory_space<vmem>>, %arg11: memref<8x128xf32, #tpu.memory_space<vmem>>) attributes {dimension_semantics = [#tpu.dimension_semantics<parallel>, #tpu.dimension_semantics<arbitrary>], iteration_bounds = array<i64: 2, 2>, scalar_prefetch = 0 : i64, scratch_operands = 0 : i64, tpu.core_type = #tpu.core_type<tc>, window_params = [{transform_indices = @transform_0, window_bounds = array<i64: 8, 128>}, {transform_indices = @transform_1, window_bounds = array<i64: 128, 128>}, {transform_indices = @transform_2, window_bounds = array<i64: 128, 128>}, {transform_indices = @transform_3, window_bounds = array<i64: 128, 128>}, {transform_indices = @transform_4, window_bounds = array<i64: 1, 128>}, {transform_indices = @transform_5, window_bounds = array<i64: 1, 128>}, {transform_indices = @transform_6, window_bounds = array<i64: 1, 128>}, {transform_indices = @transform_7, window_bounds = array<i64: 8, 128>}, {transform_indices = @transform_8, window_bounds = array<i64: 8, 128>}, {transform_indices = @transform_9, window_bounds = array<i64: 8, 128>}]} {
    %c0_i32 = arith.constant 0 : i32
    %0 = arith.cmpi eq, %arg1, %c0_i32 : i32
    %c0 = arith.constant 0 : index
    %c0_0 = arith.constant 0 : index
    %1 = vector.load %arg3[%c0, %c0_0] : memref<128x128xf32, #tpu.memory_space<vmem>>, vector<128x128xf32>
    %c0_1 = arith.constant 0 : index
    %c0_2 = arith.constant 0 : index
    %2 = vector.load %arg4[%c0_1, %c0_2] : memref<128x128xf32, #tpu.memory_space<vmem>>, vector<128x128xf32>
    %c0_3 = arith.constant 0 : index
    %c0_4 = arith.constant 0 : index
    %3 = vector.load %arg5[%c0_3, %c0_4] : memref<128x128xf32, #tpu.memory_space<vmem>>, vector<128x128xf32>
    %cst = arith.constant 0.000000e+00 : f32
    %4 = vector.broadcast %cst : f32 to vector<128x128xf32>
    %5 = arith.cmpf ogt, %2, %4 : vector<128x128xf32>
    %cst_5 = arith.constant 0.000000e+00 : f32
    %6 = vector.broadcast %cst_5 : f32 to vector<128x128xf32>
    %7 = arith.subf %6, %2 : vector<128x128xf32>
    %8 = math.exp %7 : vector<128x128xf32>
    %9 = math.log1p %8 : vector<128x128xf32>
    %10 = arith.addf %2, %9 : vector<128x128xf32>
    %11 = math.exp %2 : vector<128x128xf32>
    %12 = math.log1p %11 : vector<128x128xf32>
    %13 = arith.select %5, %10, %12 : vector<128x128xi1>, vector<128x128xf32>
    %14 = arith.mulf %13, %3 : vector<128x128xf32>
    %15 = arith.addf %1, %14 : vector<128x128xf32>
    %16 = arith.mulf %15, %15 : vector<128x128xf32>
    %17 = vector.shape_cast %16 : vector<128x128xf32> to vector<1x128x128xf32>
    %cst_6 = arith.constant dense<0.000000e+00> : vector<1xf32>
    %18 = vector.multi_reduction <add>, %17, %cst_6 [1, 2] : vector<1x128x128xf32> to vector<1xf32>
    %19 = vector.shape_cast %18 : vector<1xf32> to vector<1x1x1xf32>
    %20 = vector.extract %19[0, 0, 0] : f32 from vector<1x1x1xf32>
    %cst_7 = arith.constant -5.000000e-01 : f32
    %21 = arith.mulf %cst_7, %20 : f32
    %cst_8 = arith.constant 1.638400e+04 : f32
    %cst_9 = arith.constant 0.918938517 : f32
    %22 = arith.mulf %cst_8, %cst_9 : f32
    %23 = arith.subf %21, %22 : f32
    %24 = arith.mulf %3, %3 : vector<128x128xf32>
    %25 = vector.shape_cast %24 : vector<128x128xf32> to vector<1x128x128xf32>
    %cst_10 = arith.constant dense<0.000000e+00> : vector<1xf32>
    %26 = vector.multi_reduction <add>, %25, %cst_10 [1, 2] : vector<1x128x128xf32> to vector<1xf32>
    %27 = vector.shape_cast %26 : vector<1xf32> to vector<1x1x1xf32>
    %28 = vector.extract %27[0, 0, 0] : f32 from vector<1x1x1xf32>
    %cst_11 = arith.constant -5.000000e-01 : f32
    %29 = arith.mulf %cst_11, %28 : f32
    %30 = math.log %13 : vector<128x128xf32>
    %31 = vector.shape_cast %30 : vector<128x128xf32> to vector<1x128x128xf32>
    %cst_12 = arith.constant dense<0.000000e+00> : vector<1xf32>
    %32 = vector.multi_reduction <add>, %31, %cst_12 [1, 2] : vector<1x128x128xf32> to vector<1xf32>
    %33 = vector.shape_cast %32 : vector<1xf32> to vector<1x1x1xf32>
    %34 = vector.extract %33[0, 0, 0] : f32 from vector<1x1x1xf32>
    %35 = arith.subf %29, %34 : f32
    %cst_13 = arith.constant 1.638400e+04 : f32
    %cst_14 = arith.constant 0.918938517 : f32
    %36 = arith.mulf %cst_13, %cst_14 : f32
    %37 = arith.subf %35, %36 : f32
    %c0_15 = arith.constant 0 : index
    %c0_16 = arith.constant 0 : index
    %38 = vector.load %arg6[%c0_15, %c0_16] : memref<1x128xf32, #tpu.memory_space<vmem>>, vector<1x128xf32>
    %c0_17 = arith.constant 0 : index
    %c0_18 = arith.constant 0 : index
    %39 = vector.load %arg7[%c0_17, %c0_18] : memref<1x128xf32, #tpu.memory_space<vmem>>, vector<1x128xf32>
    %c0_19 = arith.constant 0 : index
    %c0_20 = arith.constant 0 : index
    %40 = vector.load %arg8[%c0_19, %c0_20] : memref<1x128xf32, #tpu.memory_space<vmem>>, vector<1x128xf32>
    %cst_21 = arith.constant 0.000000e+00 : f32
    %41 = vector.broadcast %cst_21 : f32 to vector<1x128xf32>
    %42 = arith.cmpf ogt, %39, %41 : vector<1x128xf32>
    %cst_22 = arith.constant 0.000000e+00 : f32
    %43 = vector.broadcast %cst_22 : f32 to vector<1x128xf32>
    %44 = arith.subf %43, %39 : vector<1x128xf32>
    %45 = math.exp %44 : vector<1x128xf32>
    %46 = math.log1p %45 : vector<1x128xf32>
    %47 = arith.addf %39, %46 : vector<1x128xf32>
    %48 = math.exp %39 : vector<1x128xf32>
    %49 = math.log1p %48 : vector<1x128xf32>
    %50 = arith.select %42, %47, %49 : vector<1x128xi1>, vector<1x128xf32>
    %51 = arith.mulf %50, %40 : vector<1x128xf32>
    %52 = arith.addf %38, %51 : vector<1x128xf32>
    %53 = arith.mulf %52, %52 : vector<1x128xf32>
    %54 = vector.shape_cast %53 : vector<1x128xf32> to vector<1x1x128xf32>
    %cst_23 = arith.constant dense<0.000000e+00> : vector<1xf32>
    %55 = vector.multi_reduction <add>, %54, %cst_23 [1, 2] : vector<1x1x128xf32> to vector<1xf32>
    %56 = vector.shape_cast %55 : vector<1xf32> to vector<1x1x1xf32>
    %57 = vector.extract %56[0, 0, 0] : f32 from vector<1x1x1xf32>
    %cst_24 = arith.constant -5.000000e-01 : f32
    %58 = arith.mulf %cst_24, %57 : f32
    %cst_25 = arith.constant 1.280000e+02 : f32
    %cst_26 = arith.constant 0.918938517 : f32
    %59 = arith.mulf %cst_25, %cst_26 : f32
    %60 = arith.subf %58, %59 : f32
    %61 = arith.mulf %40, %40 : vector<1x128xf32>
    %62 = vector.shape_cast %61 : vector<1x128xf32> to vector<1x1x128xf32>
    %cst_27 = arith.constant dense<0.000000e+00> : vector<1xf32>
    %63 = vector.multi_reduction <add>, %62, %cst_27 [1, 2] : vector<1x1x128xf32> to vector<1xf32>
    %64 = vector.shape_cast %63 : vector<1xf32> to vector<1x1x1xf32>
    %65 = vector.extract %64[0, 0, 0] : f32 from vector<1x1x1xf32>
    %cst_28 = arith.constant -5.000000e-01 : f32
    %66 = arith.mulf %cst_28, %65 : f32
    %67 = math.log %50 : vector<1x128xf32>
    %68 = vector.shape_cast %67 : vector<1x128xf32> to vector<1x1x128xf32>
    %cst_29 = arith.constant dense<0.000000e+00> : vector<1xf32>
    %69 = vector.multi_reduction <add>, %68, %cst_29 [1, 2] : vector<1x1x128xf32> to vector<1xf32>
    %70 = vector.shape_cast %69 : vector<1xf32> to vector<1x1x1xf32>
    %71 = vector.extract %70[0, 0, 0] : f32 from vector<1x1x1xf32>
    %72 = arith.subf %66, %71 : f32
    %cst_30 = arith.constant 1.280000e+02 : f32
    %cst_31 = arith.constant 0.918938517 : f32
    %73 = arith.mulf %cst_30, %cst_31 : f32
    %74 = arith.subf %72, %73 : f32
    %cst_32 = arith.constant 0.000000e+00 : f32
    %75 = arith.select %0, %60, %cst_32 : f32
    %76 = arith.addf %23, %75 : f32
    %cst_33 = arith.constant 0.000000e+00 : f32
    %77 = arith.select %0, %74, %cst_33 : f32
    %78 = arith.addf %37, %77 : f32
    %79 = vector.broadcast %76 : f32 to vector<8x128xf32>
    %c0_34 = arith.constant 0 : index
    %c0_35 = arith.constant 0 : index
    %80 = vector.load %arg10[%c0_34, %c0_35] : memref<8x128xf32, #tpu.memory_space<vmem>>, vector<8x128xf32>
    tpu.vector_store %arg10[%c0_34, %c0_35], %79 {strides = array<i32>} : memref<8x128xf32, #tpu.memory_space<vmem>>, vector<8x128xf32>,
    %81 = vector.broadcast %78 : f32 to vector<8x128xf32>
    %c0_36 = arith.constant 0 : index
    %c0_37 = arith.constant 0 : index
    %82 = vector.load %arg11[%c0_36, %c0_37] : memref<8x128xf32, #tpu.memory_space<vmem>>, vector<8x128xf32>
    tpu.vector_store %arg11[%c0_36, %c0_37], %81 {strides = array<i32>} : memref<8x128xf32, #tpu.memory_space<vmem>>, vector<8x128xf32>,
    %83 = arith.extui %0 : i1 to i32
    %c0_i32_38 = arith.constant 0 : i32
    %84 = arith.cmpi ne, %83, %c0_i32_38 : i32
    scf.if %84 {
      %90 = vector.shape_cast %52 : vector<1x128xf32> to vector<1x128xf32>
      %91 = vector.broadcast %90 : vector<1x128xf32> to vector<8x128xf32>
      %c0_46 = arith.constant 0 : index
      %c0_47 = arith.constant 0 : index
      %92 = vector.load %arg9[%c0_46, %c0_47] : memref<8x128xf32, #tpu.memory_space<vmem>>, vector<8x128xf32>
      tpu.vector_store %arg9[%c0_46, %c0_47], %91 {strides = array<i32>} : memref<8x128xf32, #tpu.memory_space<vmem>>, vector<8x128xf32>,
    } else {
    }
    %c0_39 = arith.constant 0 : index
    %c0_40 = arith.constant 0 : index
    %85 = vector.load %arg9[%c0_39, %c0_40] : memref<8x128xf32, #tpu.memory_space<vmem>>, vector<8x128xf32>
    %c0_41 = arith.constant 0 : index
    %c0_42 = arith.constant 0 : index
    %86 = vector.load %arg2[%c0_41, %c0_42] : memref<8x128xf32, #tpu.memory_space<vmem>>, vector<8x128xf32>
    %cst_43 = arith.constant dense<0.000000e+00> : vector<8x128xf32>
    %87 = tpu.matmul %86, %15, %cst_43 {dimension_numbers = #tpu.dot_dimension_numbers<[1], [1], [0], [0], [0, 0, 1, 0], [], []>} : vector<8x128xf32>, vector<128x128xf32>, vector<8x128xf32> -> vector<8x128xf32>
    %88 = arith.addf %85, %87 : vector<8x128xf32>
    %c0_44 = arith.constant 0 : index
    %c0_45 = arith.constant 0 : index
    %89 = vector.load %arg9[%c0_44, %c0_45] : memref<8x128xf32, #tpu.memory_space<vmem>>, vector<8x128xf32>
    tpu.vector_store %arg9[%c0_44, %c0_45], %88 {strides = array<i32>} : memref<8x128xf32, #tpu.memory_space<vmem>>, vector<8x128xf32>,
    return
  }
  func.func @transform_0(%arg0: i32, %arg1: i32) -> (i32, i32) {
    %c0_i32 = arith.constant 0 : i32
    %c0_i32_0 = arith.constant 0 : i32
    return %c0_i32, %arg1 : i32, i32
  }
  func.func @transform_1(%arg0: i32, %arg1: i32) -> (i32, i32) {
    %c0_i32 = arith.constant 0 : i32
    return %arg0, %arg1 : i32, i32
  }
  func.func @transform_2(%arg0: i32, %arg1: i32) -> (i32, i32) {
    %c0_i32 = arith.constant 0 : i32
    return %arg0, %arg1 : i32, i32
  }
  func.func @transform_3(%arg0: i32, %arg1: i32) -> (i32, i32) {
    %c0_i32 = arith.constant 0 : i32
    return %arg0, %arg1 : i32, i32
  }
  func.func @transform_4(%arg0: i32, %arg1: i32) -> (i32, i32) {
    %c0_i32 = arith.constant 0 : i32
    %c0_i32_0 = arith.constant 0 : i32
    return %c0_i32, %arg0 : i32, i32
  }
  func.func @transform_5(%arg0: i32, %arg1: i32) -> (i32, i32) {
    %c0_i32 = arith.constant 0 : i32
    %c0_i32_0 = arith.constant 0 : i32
    return %c0_i32, %arg0 : i32, i32
  }
  func.func @transform_6(%arg0: i32, %arg1: i32) -> (i32, i32) {
    %c0_i32 = arith.constant 0 : i32
    %c0_i32_0 = arith.constant 0 : i32
    return %c0_i32, %arg0 : i32, i32
  }
  func.func @transform_7(%arg0: i32, %arg1: i32) -> (i32, i32) {
    %c0_i32 = arith.constant 0 : i32
    %c0_i32_0 = arith.constant 0 : i32
    return %c0_i32, %arg0 : i32, i32
  }
  func.func @transform_8(%arg0: i32, %arg1: i32) -> (i32, i32) {
    %c0_i32 = arith.constant 0 : i32
    return %arg0, %arg1 : i32, i32
  }
  func.func @transform_9(%arg0: i32, %arg1: i32) -> (i32, i32) {
    %c0_i32 = arith.constant 0 : i32
    return %arg0, %arg1 : i32, i32
  }
}

</mosaic_0001>

<llo_original>
// kernel: tpu_custom_call.1
$region0: #{tpu_custom_call.1}
  #allocation0 [shape = 'u32[]', space=smem, size = 0x4, offset = 0x4, fixed_abs, tag = 'smem constant byte address 0x4 - core index']
  #allocation1 [shape = 'u32[72,128]{1,0:T(1,128)}', space=vmem, size = 0x9000, scoped, tag = 'internal scratch']
  %s0 = inlined_call_operand.hbm [shape: f32[8,256], index: 0, kind: input, shape index: {}]
  %s1 = inlined_call_operand.hbm [shape: f32[256,256], index: 1, kind: input, shape index: {}]
  %s2 = inlined_call_operand.hbm [shape: f32[256,256], index: 2, kind: input, shape index: {}]
  %s3 = inlined_call_operand.hbm [shape: f32[256,256], index: 3, kind: input, shape index: {}]
  %s4 = inlined_call_operand.vmem [shape: f32[1,256], index: 4, kind: input, shape index: {}]
  %s5 = inlined_call_operand.vmem [shape: f32[1,256], index: 5, kind: input, shape index: {}]
  %s6 = inlined_call_operand.hbm [shape: f32[1,256], index: 6, kind: input, shape index: {}]
  %s7 = inlined_call_operand.hbm [shape: f32[8,256], index: 7, kind: output, shape index: {0}]
  %s8 = inlined_call_operand.hbm [shape: f32[16,256], index: 8, kind: output, shape index: {1}]
  %s9 = inlined_call_operand.hbm [shape: f32[16,256], index: 9, kind: output, shape index: {2}]
  %10 = xla_tuple %s7, %s8, %s9
  %s11 = sld [smem:[#allocation0]]
  $region101: #{tpu_custom_call.1} parent=0
    _
  %s13 = ssub.s32 1, %s11
  %s14 = scalar_select 0, %s13, %s11
  $region1: #{tpu_custom_call.1} parent=0
    #allocation2 [shape = 'u8[8192]{0}', space=vmem, size = 0x2000, scoped, tag = 'input window, operand 0']
    #allocation3 [shape = 's32[2]{0}', space=sflag, size = 0x8, scoped, tag = 'scoped memory for tpu_custom_call.1']
    #allocation4 [shape = 's32[2]{0}', space=sflag, size = 0x8, scoped, tag = 'scoped memory for tpu_custom_call.1']
    #allocation5 [shape = 'u8[131072]{0}', space=vmem, size = 0x20000, scoped, tag = 'input window, operand 1']
    #allocation6 [shape = 's32[2]{0}', space=sflag, size = 0x8, scoped, tag = 'scoped memory for tpu_custom_call.1']
    #allocation7 [shape = 'u8[131072]{0}', space=vmem, size = 0x20000, scoped, tag = 'input window, operand 2']
    #allocation8 [shape = 'u8[131072]{0}', space=vmem, size = 0x20000, scoped, tag = 'input window, operand 3']
    #allocation9 [shape = 's32[2]{0}', space=sflag, size = 0x8, scoped, tag = 'scoped memory for tpu_custom_call.1']
    #allocation10 [shape = 'u8[1024]{0}', space=vmem, size = 0x400, scoped, tag = 'input window, operand 6']
    #allocation11 [shape = 'u8[8192]{0}', space=vmem, size = 0x2000, scoped, tag = 'output window, operand 0']
    #allocation12 [shape = 'u8[8192]{0}', space=vmem, size = 0x2000, scoped, tag = 'output window, operand 1']
    #allocation13 [shape = 's32[2]{0}', space=sflag, size = 0x8, scoped, tag = 'scoped memory for tpu_custom_call.1']
    #allocation14 [shape = 'u8[8192]{0}', space=vmem, size = 0x2000, scoped, tag = 'output window, operand 2']
    %15 = vsyncpa [#allocation3], 0
    %s16 = scalar_lea.sflag [#allocation3], 1
    %17 = vsyncpa %s16, 0
    %18 = vsyncpa [#allocation6], 0
    %s19 = scalar_lea.sflag [#allocation6], 1
    %20 = vsyncpa %s19, 0
    %21 = vsyncpa [#allocation9], 0
    %s22 = scalar_lea.sflag [#allocation9], 1
    %23 = vsyncpa %s22, 0
    %24 = vsyncpa [#allocation4], 0
    %s25 = scalar_lea.sflag [#allocation4], 1
    %26 = vsyncpa %s25, 0
    %27 = vsyncpa [#allocation13], 0
    %s28 = scalar_lea.sflag [#allocation13], 1
    %29 = vsyncpa %s28, 0
    loop: start=0, step=1, limit=6
    $region2: #{tpu_custom_call.1} parent=1 // loop_pre_header
      _
    $region3: #{tpu_custom_call.1} parent=1 // loop_header
      %s31 = sphi 0, %s35
      %p32 = scmp.ge.s32.totalorder %s31, 6
      %s38 = sphi 0, %s50
      %s39 = sphi 0, %s46
      %s40 = sphi 0, %s38
      %s41 = sphi 0, %s39
      %s42 = sphi 0, %s40
      %s43 = sphi 0, %s41
      %s53 = sphi 0, %s55
      %s56 = sphi 0, %s53
      %s57 = sphi 0, %s56
      %s73 = sphi 0, %s57
      %s81 = sphi 0, %s83
      %s84 = sphi 0, %s81
      %s85 = sphi 0, %s84
      %s101 = sphi 0, %s85
      %s109 = sphi 0, %s111
      %s112 = sphi 0, %s109
      %s113 = sphi 0, %s112
      %s129 = sphi 0, %s113
      %s137 = sphi 0, %s139
      %s140 = sphi 0, %s137
      %s141 = sphi 0, %s140
      %s157 = sphi 0, %s141
      %s163 = sphi 0, %s165
      %s166 = sphi 0, %s163
      %s167 = sphi 0, %s166
      %s183 = sphi 0, %s167
      %s189 = sphi 0, %s191
      %s192 = sphi 0, %s189
      %s193 = sphi 0, %s192
      %s209 = sphi 0, %s193
      %s215 = sphi 0, %s217
      %s218 = sphi 0, %s215
      %s219 = sphi 0, %s218
      %s235 = sphi 0, %s219
      %s241 = sphi 0, %s243
      %s244 = sphi 0, %s241
      %s245 = sphi 0, %s244
      %s261 = sphi 0, %s245
      %s269 = sphi 0, %s271
      %s272 = sphi 0, %s269
      %s273 = sphi 0, %s272
      %s289 = sphi 0, %s273
      %s297 = sphi 0, %s299
      %s300 = sphi 0, %s297
      %s301 = sphi 0, %s300
      %s317 = sphi 0, %s301
    $region4: #{tpu_custom_call.1} parent=1 // loop_header_branch
      %34 = sbr.rel (%p32) target = $region8
    $region5: #{tpu_custom_call.1} parent=1 // loop_body
      %s36 = ssub.s32 %s31, 1
      %s37 = ssub.s32 %s31, 2
      %s44 = sadd.s32 1, %s39
      %p45 = scmp.ge.s32.totalorder %s44, 2
      %s46 = scalar_select %p45, 0, %s44
      %s47 = sadd.s32 1, %s38
      %s48 = scalar_select %p45, %s47, %s38
      %p49 = scmp.ge.s32.totalorder %s48, 2
      %s50 = scalar_select %p49, 0, %s48
      %s51 = ssub.s32 %s39, %s46
      %p52 = scmp.eq.s32.totalorder %s51, 0
      %s54 = sadd.s32 %s53, 1
      %s55 = scalar_select %p52, %s53, %s54
      %p58 = pneg %p52
      %p59 = scmp.eq.s32.totalorder %s31, 3
      %p60 = por %p58, %p59
      %p61 = scmp.ne.s32.totalorder %s53, %s56
      %p62 = scmp.eq.s32.totalorder %s31, 0
      %p63 = por %p61, %p62
      %p64 = scmp.ne.s32.totalorder %s53, %s56
      %p65 = scmp.eq.s32.totalorder %s36, 3
      %p66 = por %p64, %p65
      %p67 = scmp.ne.s32.totalorder %s56, %s57
      %p68 = scmp.eq.s32.totalorder %s36, 0
      %p69 = por %p67, %p68
      %p70 = scmp.ne.s32.totalorder %s56, %s57
      %p71 = scmp.eq.s32.totalorder %s37, 3
      %p72 = por %p70, %p71
      %p74 = scmp.ne.s32.totalorder %s57, %s73
      %p75 = scmp.eq.s32.totalorder %s37, 0
      %p76 = por %p74, %p75
      %s77 = ssub.s32 %s38, %s50
      %s78 = ssub.s32 %s39, %s46
      %s79 = sor.u32 %s77, %s78
      %p80 = scmp.eq.s32.totalorder %s79, 0
      %s82 = sadd.s32 %s81, 1
      %s83 = scalar_select %p80, %s81, %s82
      %p86 = pneg %p80
      %p87 = scmp.eq.s32.totalorder %s31, 3
      %p88 = por %p86, %p87
      %p89 = scmp.ne.s32.totalorder %s81, %s84
      %p90 = scmp.eq.s32.totalorder %s31, 0
      %p91 = por %p89, %p90
      %p92 = scmp.ne.s32.totalorder %s81, %s84
      %p93 = scmp.eq.s32.totalorder %s36, 3
      %p94 = por %p92, %p93
      %p95 = scmp.ne.s32.totalorder %s84, %s85
      %p96 = scmp.eq.s32.totalorder %s36, 0
      %p97 = por %p95, %p96
      %p98 = scmp.ne.s32.totalorder %s84, %s85
      %p99 = scmp.eq.s32.totalorder %s37, 3
      %p100 = por %p98, %p99
      %p102 = scmp.ne.s32.totalorder %s85, %s101
      %p103 = scmp.eq.s32.totalorder %s37, 0
      %p104 = por %p102, %p103
      %s105 = ssub.s32 %s38, %s50
      %s106 = ssub.s32 %s39, %s46
      %s107 = sor.u32 %s105, %s106
      %p108 = scmp.eq.s32.totalorder %s107, 0
      %s110 = sadd.s32 %s109, 1
      %s111 = scalar_select %p108, %s109, %s110
      %p114 = pneg %p108
      %p115 = scmp.eq.s32.totalorder %s31, 3
      %p116 = por %p114, %p115
      %p117 = scmp.ne.s32.totalorder %s109, %s112
      %p118 = scmp.eq.s32.totalorder %s31, 0
      %p119 = por %p117, %p118
      %p120 = scmp.ne.s32.totalorder %s109, %s112
      %p121 = scmp.eq.s32.totalorder %s36, 3
      %p122 = por %p120, %p121
      %p123 = scmp.ne.s32.totalorder %s112, %s113
      %p124 = scmp.eq.s32.totalorder %s36, 0
      %p125 = por %p123, %p124
      %p126 = scmp.ne.s32.totalorder %s112, %s113
      %p127 = scmp.eq.s32.totalorder %s37, 3
      %p128 = por %p126, %p127
      %p130 = scmp.ne.s32.totalorder %s113, %s129
      %p131 = scmp.eq.s32.totalorder %s37, 0
      %p132 = por %p130, %p131
      %s133 = ssub.s32 %s38, %s50
      %s134 = ssub.s32 %s39, %s46
      %s135 = sor.u32 %s133, %s134
      %p136 = scmp.eq.s32.totalorder %s135, 0
      %s138 = sadd.s32 %s137, 1
      %s139 = scalar_select %p136, %s137, %s138
      %p142 = pneg %p136
      %p143 = scmp.eq.s32.totalorder %s31, 3
      %p144 = por %p142, %p143
      %p145 = scmp.ne.s32.totalorder %s137, %s140
      %p146 = scmp.eq.s32.totalorder %s31, 0
      %p147 = por %p145, %p146
      %p148 = scmp.ne.s32.totalorder %s137, %s140
      %p149 = scmp.eq.s32.totalorder %s36, 3
      %p150 = por %p148, %p149
      %p151 = scmp.ne.s32.totalorder %s140, %s141
      %p152 = scmp.eq.s32.totalorder %s36, 0
      %p153 = por %p151, %p152
      %p154 = scmp.ne.s32.totalorder %s140, %s141
      %p155 = scmp.eq.s32.totalorder %s37, 3
      %p156 = por %p154, %p155
      %p158 = scmp.ne.s32.totalorder %s141, %s157
      %p159 = scmp.eq.s32.totalorder %s37, 0
      %p160 = por %p158, %p159
      %s161 = ssub.s32 %s38, %s50
      %p162 = scmp.eq.s32.totalorder %s161, 0
      %s164 = sadd.s32 %s163, 1
      %s165 = scalar_select %p162, %s163, %s164
      %p168 = pneg %p162
      %p169 = scmp.eq.s32.totalorder %s31, 3
      %p170 = por %p168, %p169
      %p171 = scmp.ne.s32.totalorder %s163, %s166
      %p172 = scmp.eq.s32.totalorder %s31, 0
      %p173 = por %p171, %p172
      %p174 = scmp.ne.s32.totalorder %s163, %s166
      %p175 = scmp.eq.s32.totalorder %s36, 3
      %p176 = por %p174, %p175
      %p177 = scmp.ne.s32.totalorder %s166, %s167
      %p178 = scmp.eq.s32.totalorder %s36, 0
      %p179 = por %p177, %p178
      %p180 = scmp.ne.s32.totalorder %s166, %s167
      %p181 = scmp.eq.s32.totalorder %s37, 3
      %p182 = por %p180, %p181
      %p184 = scmp.ne.s32.totalorder %s167, %s183
      %p185 = scmp.eq.s32.totalorder %s37, 0
      %p186 = por %p184, %p185
      %s187 = ssub.s32 %s38, %s50
      %p188 = scmp.eq.s32.totalorder %s187, 0
      %s190 = sadd.s32 %s189, 1
      %s191 = scalar_select %p188, %s189, %s190
      %p194 = pneg %p188
      %p195 = scmp.eq.s32.totalorder %s31, 3
      %p196 = por %p194, %p195
      %p197 = scmp.ne.s32.totalorder %s189, %s192
      %p198 = scmp.eq.s32.totalorder %s31, 0
      %p199 = por %p197, %p198
      %p200 = scmp.ne.s32.totalorder %s189, %s192
      %p201 = scmp.eq.s32.totalorder %s36, 3
      %p202 = por %p200, %p201
      %p203 = scmp.ne.s32.totalorder %s192, %s193
      %p204 = scmp.eq.s32.totalorder %s36, 0
      %p205 = por %p203, %p204
      %p206 = scmp.ne.s32.totalorder %s192, %s193
      %p207 = scmp.eq.s32.totalorder %s37, 3
      %p208 = por %p206, %p207
      %p210 = scmp.ne.s32.totalorder %s193, %s209
      %p211 = scmp.eq.s32.totalorder %s37, 0
      %p212 = por %p210, %p211
      %s213 = ssub.s32 %s38, %s50
      %p214 = scmp.eq.s32.totalorder %s213, 0
      %s216 = sadd.s32 %s215, 1
      %s217 = scalar_select %p214, %s215, %s216
      %p220 = pneg %p214
      %p221 = scmp.eq.s32.totalorder %s31, 3
      %p222 = por %p220, %p221
      %p223 = scmp.ne.s32.totalorder %s215, %s218
      %p224 = scmp.eq.s32.totalorder %s31, 0
      %p225 = por %p223, %p224
      %p226 = scmp.ne.s32.totalorder %s215, %s218
      %p227 = scmp.eq.s32.totalorder %s36, 3
      %p228 = por %p226, %p227
      %p229 = scmp.ne.s32.totalorder %s218, %s219
      %p230 = scmp.eq.s32.totalorder %s36, 0
      %p231 = por %p229, %p230
      %p232 = scmp.ne.s32.totalorder %s218, %s219
      %p233 = scmp.eq.s32.totalorder %s37, 3
      %p234 = por %p232, %p233
      %p236 = scmp.ne.s32.totalorder %s219, %s235
      %p237 = scmp.eq.s32.totalorder %s37, 0
      %p238 = por %p236, %p237
      %s239 = ssub.s32 %s38, %s50
      %p240 = scmp.eq.s32.totalorder %s239, 0
      %s242 = sadd.s32 %s241, 1
      %s243 = scalar_select %p240, %s241, %s242
      %p246 = pneg %p240
      %p247 = scmp.eq.s32.totalorder %s31, 3
      %p248 = por %p246, %p247
      %p249 = scmp.ne.s32.totalorder %s241, %s244
      %p250 = scmp.eq.s32.totalorder %s31, 0
      %p251 = por %p249, %p250
      %p252 = scmp.ne.s32.totalorder %s241, %s244
      %p253 = scmp.eq.s32.totalorder %s36, 3
      %p254 = por %p252, %p253
      %p255 = scmp.ne.s32.totalorder %s244, %s245
      %p256 = scmp.eq.s32.totalorder %s36, 0
      %p257 = por %p255, %p256
      %p258 = scmp.ne.s32.totalorder %s244, %s245
      %p259 = scmp.eq.s32.totalorder %s37, 3
      %p260 = por %p258, %p259
      %p262 = scmp.ne.s32.totalorder %s245, %s261
      %p263 = scmp.eq.s32.totalorder %s37, 0
      %p264 = por %p262, %p263
      %s265 = ssub.s32 %s38, %s50
      %s266 = ssub.s32 %s39, %s46
      %s267 = sor.u32 %s265, %s266
      %p268 = scmp.eq.s32.totalorder %s267, 0
      %s270 = sadd.s32 %s269, 1
      %s271 = scalar_select %p268, %s269, %s270
      %p274 = pneg %p268
      %p275 = scmp.eq.s32.totalorder %s31, 3
      %p276 = por %p274, %p275
      %p277 = scmp.ne.s32.totalorder %s269, %s272
      %p278 = scmp.eq.s32.totalorder %s31, 0
      %p279 = por %p277, %p278
      %p280 = scmp.ne.s32.totalorder %s269, %s272
      %p281 = scmp.eq.s32.totalorder %s36, 3
      %p282 = por %p280, %p281
      %p283 = scmp.ne.s32.totalorder %s272, %s273
      %p284 = scmp.eq.s32.totalorder %s36, 0
      %p285 = por %p283, %p284
      %p286 = scmp.ne.s32.totalorder %s272, %s273
      %p287 = scmp.eq.s32.totalorder %s37, 3
      %p288 = por %p286, %p287
      %p290 = scmp.ne.s32.totalorder %s273, %s289
      %p291 = scmp.eq.s32.totalorder %s37, 0
      %p292 = por %p290, %p291
      %s293 = ssub.s32 %s38, %s50
      %s294 = ssub.s32 %s39, %s46
      %s295 = sor.u32 %s293, %s294
      %p296 = scmp.eq.s32.totalorder %s295, 0
      %s298 = sadd.s32 %s297, 1
      %s299 = scalar_select %p296, %s297, %s298
      %p302 = pneg %p296
      %p303 = scmp.eq.s32.totalorder %s31, 3
      %p304 = por %p302, %p303
      %p305 = scmp.ne.s32.totalorder %s297, %s300
      %p306 = scmp.eq.s32.totalorder %s31, 0
      %p307 = por %p305, %p306
      %p308 = scmp.ne.s32.totalorder %s297, %s300
      %p309 = scmp.eq.s32.totalorder %s36, 3
      %p310 = por %p308, %p309
      %p311 = scmp.ne.s32.totalorder %s300, %s301
      %p312 = scmp.eq.s32.totalorder %s36, 0
      %p313 = por %p311, %p312
      %p314 = scmp.ne.s32.totalorder %s300, %s301
      %p315 = scmp.eq.s32.totalorder %s37, 3
      %p316 = por %p314, %p315
      %p318 = scmp.ne.s32.totalorder %s301, %s317
      %p319 = scmp.eq.s32.totalorder %s37, 0
      %p320 = por %p318, %p319
      %p321 = scmp.le.s32.totalorder 1, %s31
      %p322 = scmp.lt.s32.totalorder %s31, 5
      %p323 = pnand %p321, %p322
      %p324 = pneg %p323
      // Predicated region
      $region9: #{tpu_custom_call.1} parent=5 // pred_check
        _
      $region10: #{tpu_custom_call.1} parent=5 // pred_check_branch
        %326 = sbr.rel (%p323) target = $region12
      $region11: #{tpu_custom_call.1} parent=5 // pred_region
        %s327 = ssub.s32 %s31, 1
      $region12: #{tpu_custom_call.1} parent=5 // pred_fallthru
        _
      %p328 = scmp.lt.s32.totalorder %s31, 4
      // Predicated region
      $region13: #{tpu_custom_call.1} parent=5 // pred_check
        %p329 = pneg %p328
      $region14: #{tpu_custom_call.1} parent=5 // pred_check_branch
        %331 = sbr.rel (%p329) target = $region16
      $region15: #{tpu_custom_call.1} parent=5 // pred_region
        // Predicated region
        $region17: #{tpu_custom_call.1} parent=15 // pred_check
          %p332 = pneg %p63
        $region18: #{tpu_custom_call.1} parent=15 // pred_check_branch
          %334 = sbr.rel (%p332) target = $region20
        $region19: #{tpu_custom_call.1} parent=15 // pred_region
          %s335 = sand.u32 %s53, 1
          %s336 = scalar_lea.sflag [#allocation3], %s335
          %s337 = sand.u32 %s53, 1
          %s338 = smul.addr %s337, 8
          %s339 = scalar_lea.vmem [#allocation2], %s338
          %341 = vsyncadd %s336, 0
          %s342 = smul.addr %s39, 8
          %s343 = scalar_lea.hbm %s0, %s342
          %s345 = sshll.u32 %s343, 4
          %s346 = int_to_ptr.hbm [resolvable:$true] %s345
          %s347 = sshll.u32 %s339, 4
          %s348 = int_to_ptr.vmem [resolvable:$true] %s347
          %350 = dma.hbm_to_vmem [thread:$0]  %s346, 128, %s348, %s336
        $region20: #{tpu_custom_call.1} parent=15 // pred_fallthru
          _
        // Predicated region
        $region21: #{tpu_custom_call.1} parent=15 // pred_check
          %p351 = pneg %p91
        $region22: #{tpu_custom_call.1} parent=15 // pred_check_branch
          %353 = sbr.rel (%p351) target = $region24
        $region23: #{tpu_custom_call.1} parent=15 // pred_region
          %s354 = sand.u32 %s31, 1
          %s355 = scalar_lea.sflag [#allocation6], %s354
          %s356 = sand.u32 %s81, 1
          %s357 = smul.addr %s356, 128
          %s358 = scalar_lea.vmem [#allocation5], %s357
          %s359 = smul.u32 16, %s38
          %361 = vsyncadd %s355, 0
          %s362 = smul.addr %s359, 2
          %s363 = sadd.s32 %s39, %s362
          %s364 = smul.addr %s363, 8
          %s365 = scalar_lea.hbm %s1, %s364
          %s366 = sshll.u32 %s365, 4
          %s367 = int_to_ptr.hbm [resolvable:$true] %s366
          %s368 = sshll.u32 %s358, 4
          %s369 = int_to_ptr.vmem [resolvable:$true] %s368
          %374 = dma.hbm_to_vmem [thread:$0]  %s367, 2048, %s369, %s355, 256, 128, 8
        $region24: #{tpu_custom_call.1} parent=15 // pred_fallthru
          _
        // Predicated region
        $region25: #{tpu_custom_call.1} parent=15 // pred_check
          %p375 = pneg %p119
        $region26: #{tpu_custom_call.1} parent=15 // pred_check_branch
          %377 = sbr.rel (%p375) target = $region28
        $region27: #{tpu_custom_call.1} parent=15 // pred_region
          %s378 = sand.u32 %s31, 1
          %s379 = scalar_lea.sflag [#allocation6], %s378
          %s380 = sand.u32 %s109, 1
          %s381 = smul.addr %s380, 128
          %s382 = scalar_lea.vmem [#allocation7], %s381
          %s383 = smul.u32 16, %s38
          %385 = vsyncadd %s379, 0
          %s386 = smul.addr %s383, 2
          %s387 = sadd.s32 %s39, %s386
          %s388 = smul.addr %s387, 8
          %s389 = scalar_lea.hbm %s2, %s388
          %s390 = sshll.u32 %s389, 4
          %s391 = int_to_ptr.hbm [resolvable:$true] %s390
          %s392 = sshll.u32 %s382, 4
          %s393 = int_to_ptr.vmem [resolvable:$true] %s392
          %398 = dma.hbm_to_vmem [thread:$0]  %s391, 2048, %s393, %s379, 256, 128, 8
        $region28: #{tpu_custom_call.1} parent=15 // pred_fallthru
          _
        // Predicated region
        $region29: #{tpu_custom_call.1} parent=15 // pred_check
          %p399 = pneg %p147
        $region30: #{tpu_custom_call.1} parent=15 // pred_check_branch
          %401 = sbr.rel (%p399) target = $region32
        $region31: #{tpu_custom_call.1} parent=15 // pred_region
          %s402 = sand.u32 %s31, 1
          %s403 = scalar_lea.sflag [#allocation9], %s402
          %s404 = sand.u32 %s137, 1
          %s405 = smul.addr %s404, 128
          %s406 = scalar_lea.vmem [#allocation8], %s405
          %s407 = smul.u32 16, %s38
          %409 = vsyncadd %s403, 0
          %s410 = smul.addr %s407, 2
          %s411 = sadd.s32 %s39, %s410
          %s412 = smul.addr %s411, 8
          %s413 = scalar_lea.hbm %s3, %s412
          %s414 = sshll.u32 %s413, 4
          %s415 = int_to_ptr.hbm [resolvable:$true] %s414
          %s416 = sshll.u32 %s406, 4
          %s417 = int_to_ptr.vmem [resolvable:$true] %s416
          %422 = dma.hbm_to_vmem [thread:$0]  %s415, 2048, %s417, %s403, 256, 128, 8
        $region32: #{tpu_custom_call.1} parent=15 // pred_fallthru
          _
        // Predicated region
        $region33: #{tpu_custom_call.1} parent=15 // pred_check
          %p423 = pneg %p173
        $region34: #{tpu_custom_call.1} parent=15 // pred_check_branch
          %425 = sbr.rel (%p423) target = $region36
        $region35: #{tpu_custom_call.1} parent=15 // pred_region
          %p426 = scmp.lt.s32.totalorder %s38, 1
          %s427 = scalar_select %p426, %s38, 1
          %s428 = scalar_lea.vmem %s4, %s427
        $region36: #{tpu_custom_call.1} parent=15 // pred_fallthru
          _
        // Predicated region
        $region37: #{tpu_custom_call.1} parent=15 // pred_check
          %p429 = pneg %p199
        $region38: #{tpu_custom_call.1} parent=15 // pred_check_branch
          %431 = sbr.rel (%p429) target = $region40
        $region39: #{tpu_custom_call.1} parent=15 // pred_region
          %p432 = scmp.lt.s32.totalorder %s38, 1
          %s433 = scalar_select %p432, %s38, 1
          %s434 = scalar_lea.vmem %s5, %s433
        $region40: #{tpu_custom_call.1} parent=15 // pred_fallthru
          _
        // Predicated region
        $region41: #{tpu_custom_call.1} parent=15 // pred_check
          %p435 = pneg %p225
        $region42: #{tpu_custom_call.1} parent=15 // pred_check_branch
          %437 = sbr.rel (%p435) target = $region44
        $region43: #{tpu_custom_call.1} parent=15 // pred_region
          %s438 = sand.u32 %s31, 1
          %s439 = scalar_lea.sflag [#allocation9], %s438
          %s440 = sand.u32 %s215, 1
          %s441 = scalar_lea.vmem [#allocation10], %s440
          %443 = vsyncadd %s439, 0
          %s444 = scalar_lea.hbm %s6, %s38
          %s446 = sshll.u32 %s444, 4
          %s447 = int_to_ptr.hbm [resolvable:$true] %s446
          %s448 = sshll.u32 %s441, 4
          %s449 = int_to_ptr.vmem [resolvable:$true] %s448
          %451 = dma.hbm_to_vmem [thread:$0]  %s447, 16, %s449, %s439
        $region44: #{tpu_custom_call.1} parent=15 // pred_fallthru
          _
      $region16: #{tpu_custom_call.1} parent=5 // pred_fallthru
        _
      %p452 = scmp.le.s32.totalorder 1, %s31
      %p453 = scmp.lt.s32.totalorder %s31, 5
      %p454 = pnand %p452, %p453
      %p455 = pneg %p454
      // Predicated region
      $region45: #{tpu_custom_call.1} parent=5 // pred_check
        _
      $region46: #{tpu_custom_call.1} parent=5 // pred_check_branch
        %457 = sbr.rel (%p454) target = $region48
      $region47: #{tpu_custom_call.1} parent=5 // pred_region
        %s458 = ssub.s32 %s31, 1
        %s459 = sand.u32 %s56, 1
        %s460 = scalar_lea.sflag [#allocation3], %s459
        %s461 = sand.u32 %s56, 1
        %s462 = smul.addr %s461, 8
        %s463 = scalar_lea.vmem [#allocation2], %s462
        // Predicated region
        $region49: #{tpu_custom_call.1} parent=47 // pred_check
          %p464 = pneg %p69
        $region50: #{tpu_custom_call.1} parent=47 // pred_check_branch
          %466 = sbr.rel (%p464) target = $region52
        $region51: #{tpu_custom_call.1} parent=47 // pred_region
          %468 = dma.done %s460, 128
        $region52: #{tpu_custom_call.1} parent=47 // pred_fallthru
          _
        %s469 = sand.u32 %s36, 1
        %s470 = scalar_lea.sflag [#allocation6], %s469
        %s471 = sand.u32 %s84, 1
        %s472 = smul.addr %s471, 128
        %s473 = scalar_lea.vmem [#allocation5], %s472
        // Predicated region
        $region53: #{tpu_custom_call.1} parent=47 // pred_check
          %p474 = pneg %p97
        $region54: #{tpu_custom_call.1} parent=47 // pred_check_branch
          %476 = sbr.rel (%p474) target = $region56
        $region55: #{tpu_custom_call.1} parent=47 // pred_region
          %478 = dma.done %s470, 2048
        $region56: #{tpu_custom_call.1} parent=47 // pred_fallthru
          _
        %s479 = sand.u32 %s36, 1
        %s480 = scalar_lea.sflag [#allocation6], %s479
        %s481 = sand.u32 %s112, 1
        %s482 = smul.addr %s481, 128
        %s483 = scalar_lea.vmem [#allocation7], %s482
        // Predicated region
        $region57: #{tpu_custom_call.1} parent=47 // pred_check
          %p484 = pneg %p125
        $region58: #{tpu_custom_call.1} parent=47 // pred_check_branch
          %486 = sbr.rel (%p484) target = $region60
        $region59: #{tpu_custom_call.1} parent=47 // pred_region
          %488 = dma.done %s480, 2048
        $region60: #{tpu_custom_call.1} parent=47 // pred_fallthru
          _
        %s489 = sand.u32 %s36, 1
        %s490 = scalar_lea.sflag [#allocation9], %s489
        %s491 = sand.u32 %s140, 1
        %s492 = smul.addr %s491, 128
        %s493 = scalar_lea.vmem [#allocation8], %s492
        // Predicated region
        $region61: #{tpu_custom_call.1} parent=47 // pred_check
          %p494 = pneg %p153
        $region62: #{tpu_custom_call.1} parent=47 // pred_check_branch
          %496 = sbr.rel (%p494) target = $region64
        $region63: #{tpu_custom_call.1} parent=47 // pred_region
          %498 = dma.done %s490, 2048
        $region64: #{tpu_custom_call.1} parent=47 // pred_fallthru
          _
        %s499 = sand.u32 %s36, 1
        %s500 = scalar_lea.sflag [#allocation9], %s499
        %s501 = sand.u32 %s218, 1
        %s502 = scalar_lea.vmem [#allocation10], %s501
        // Predicated region
        $region65: #{tpu_custom_call.1} parent=47 // pred_check
          %p503 = pneg %p231
        $region66: #{tpu_custom_call.1} parent=47 // pred_check_branch
          %505 = sbr.rel (%p503) target = $region68
        $region67: #{tpu_custom_call.1} parent=47 // pred_region
          %507 = dma.done %s500, 16
        $region68: #{tpu_custom_call.1} parent=47 // pred_fallthru
          _
        %s508 = sand.u32 %s56, 1
        %s509 = scalar_lea.sflag [#allocation3], %s508
        %s510 = sand.u32 %s56, 1
        %s511 = smul.addr %s510, 8
        %s512 = scalar_lea.vmem [#allocation2], %s511
        %p513 = pneg %p69
        %p514 = pneg %p66
        %s515 = sand.u32 %s36, 1
        %s516 = scalar_lea.sflag [#allocation6], %s515
        %s517 = sand.u32 %s84, 1
        %s518 = smul.addr %s517, 128
        %s519 = scalar_lea.vmem [#allocation5], %s518
        %p520 = pneg %p97
        %p521 = pneg %p94
        %s522 = sand.u32 %s36, 1
        %s523 = scalar_lea.sflag [#allocation6], %s522
        %s524 = sand.u32 %s112, 1
        %s525 = smul.addr %s524, 128
        %s526 = scalar_lea.vmem [#allocation7], %s525
        %p527 = pneg %p125
        %p528 = pneg %p122
        %s529 = sand.u32 %s36, 1
        %s530 = scalar_lea.sflag [#allocation9], %s529
        %s531 = sand.u32 %s140, 1
        %s532 = smul.addr %s531, 128
        %s533 = scalar_lea.vmem [#allocation8], %s532
        %p534 = pneg %p153
        %p535 = pneg %p150
        %p536 = scmp.lt.s32.totalorder %s40, 1
        %s537 = scalar_select %p536, %s40, 1
        %s538 = scalar_lea.vmem %s4, %s537
        %p539 = pneg %p179
        %p540 = pneg %p176
        %p541 = scmp.lt.s32.totalorder %s40, 1
        %s542 = scalar_select %p541, %s40, 1
        %s543 = scalar_lea.vmem %s5, %s542
        %p544 = pneg %p205
        %p545 = pneg %p202
        %s546 = sand.u32 %s36, 1
        %s547 = scalar_lea.sflag [#allocation9], %s546
        %s548 = sand.u32 %s218, 1
        %s549 = scalar_lea.vmem [#allocation10], %s548
        %p550 = pneg %p231
        %p551 = pneg %p228
        %p552 = pneg %p257
        %p553 = pneg %p254
        %s554 = sand.u32 %s244, 1
        %s555 = scalar_lea.sflag [#allocation4], %s554
        %s556 = sand.u32 %s244, 1
        %s557 = smul.addr %s556, 8
        %s558 = scalar_lea.vmem [#allocation11], %s557
        %p559 = pneg %p285
        %p560 = pneg %p282
        %s561 = sand.u32 %s36, 1
        %s562 = scalar_lea.sflag [#allocation13], %s561
        %s563 = sand.u32 %s272, 1
        %s564 = smul.addr %s563, 8
        %s565 = scalar_lea.vmem [#allocation12], %s564
        %p566 = pneg %p313
        %p567 = pneg %p310
        %s568 = sand.u32 %s36, 1
        %s569 = scalar_lea.sflag [#allocation13], %s568
        %s570 = sand.u32 %s300, 1
        %s571 = smul.addr %s570, 8
        %s572 = scalar_lea.vmem [#allocation14], %s571
        %s573 = smul.u32 16, %s40
        %s574 = smul.u32 16, %s40
        %s575 = smul.u32 16, %s40
        %p576 = scmp.lt.s32.totalorder %s40, 1
        %s577 = scalar_select %p576, %s40, 1
        %s578 = scalar_lea.vmem %s4, %s577
        %p579 = scmp.lt.s32.totalorder %s40, 1
        %s580 = scalar_select %p579, %s40, 1
        %s581 = scalar_lea.vmem %s5, %s580
        %p582 = scmp.eq.s32.totalorder %s41, 0
        %v583 = vld [vmem:[%s473] sm:$0xff]
        %v584 = vld [vmem:[%s473 + $0x8] sm:$0xff]
        %v585 = vld [vmem:[%s473 + $0x10] sm:$0xff]
        %v586 = vld [vmem:[%s473 + $0x18] sm:$0xff]
        %v587 = vld [vmem:[%s473 + $0x20] sm:$0xff]
        %v588 = vld [vmem:[%s473 + $0x28] sm:$0xff]
        %v589 = vld [vmem:[%s473 + $0x30] sm:$0xff]
        %v590 = vld [vmem:[%s473 + $0x38] sm:$0xff]
        %v591 = vld [vmem:[%s473 + $0x40] sm:$0xff]
        %v592 = vld [vmem:[%s473 + $0x48] sm:$0xff]
        %v593 = vld [vmem:[%s473 + $0x50] sm:$0xff]
        %v594 = vld [vmem:[%s473 + $0x58] sm:$0xff]
        %v595 = vld [vmem:[%s473 + $0x60] sm:$0xff]
        %v596 = vld [vmem:[%s473 + $0x68] sm:$0xff]
        %v597 = vld [vmem:[%s473 + $0x70] sm:$0xff]
        %v598 = vld [vmem:[%s473 + $0x78] sm:$0xff]
        %v599 = vld [vmem:[%s483] sm:$0xff]
        %v600 = vld [vmem:[%s483 + $0x8] sm:$0xff]
        %v601 = vld [vmem:[%s483 + $0x10] sm:$0xff]
        %v602 = vld [vmem:[%s483 + $0x18] sm:$0xff]
        %v603 = vld [vmem:[%s483 + $0x20] sm:$0xff]
        %v604 = vld [vmem:[%s483 + $0x28] sm:$0xff]
        %v605 = vld [vmem:[%s483 + $0x30] sm:$0xff]
        %v606 = vld [vmem:[%s483 + $0x38] sm:$0xff]
        %v607 = vld [vmem:[%s483 + $0x40] sm:$0xff]
        %v608 = vld [vmem:[%s483 + $0x48] sm:$0xff]
        %v609 = vld [vmem:[%s483 + $0x50] sm:$0xff]
        %v610 = vld [vmem:[%s483 + $0x58] sm:$0xff]
        %v611 = vld [vmem:[%s483 + $0x60] sm:$0xff]
        %v612 = vld [vmem:[%s483 + $0x68] sm:$0xff]
        %v613 = vld [vmem:[%s483 + $0x70] sm:$0xff]
        %v614 = vld [vmem:[%s483 + $0x78] sm:$0xff]
        %v615 = vld [vmem:[%s493] sm:$0xff]
        %v616 = vld [vmem:[%s493 + $0x8] sm:$0xff]
        %v617 = vld [vmem:[%s493 + $0x10] sm:$0xff]
        %v618 = vld [vmem:[%s493 + $0x18] sm:$0xff]
        %v619 = vld [vmem:[%s493 + $0x20] sm:$0xff]
        %v620 = vld [vmem:[%s493 + $0x28] sm:$0xff]
        %v621 = vld [vmem:[%s493 + $0x30] sm:$0xff]
        %v622 = vld [vmem:[%s493 + $0x38] sm:$0xff]
        %v623 = vld [vmem:[%s493 + $0x40] sm:$0xff]
        %v624 = vld [vmem:[%s493 + $0x48] sm:$0xff]
        %v625 = vld [vmem:[%s493 + $0x50] sm:$0xff]
        %v626 = vld [vmem:[%s493 + $0x58] sm:$0xff]
        %v627 = vld [vmem:[%s493 + $0x60] sm:$0xff]
        %v628 = vld [vmem:[%s493 + $0x68] sm:$0xff]
        %v629 = vld [vmem:[%s493 + $0x70] sm:$0xff]
        %v630 = vld [vmem:[%s493 + $0x78] sm:$0xff]
        %vm631 = vcmp.gt.f32.partialorder %v599, 0.0
        %vm632 = vcmp.gt.f32.partialorder %v600, 0.0
        %vm633 = vcmp.gt.f32.partialorder %v601, 0.0
        %vm634 = vcmp.gt.f32.partialorder %v602, 0.0
        %vm635 = vcmp.gt.f32.partialorder %v603, 0.0
        %vm636 = vcmp.gt.f32.partialorder %v604, 0.0
        %vm637 = vcmp.gt.f32.partialorder %v605, 0.0
        %vm638 = vcmp.gt.f32.partialorder %v606, 0.0
        %vm639 = vcmp.gt.f32.partialorder %v607, 0.0
        %vm640 = vcmp.gt.f32.partialorder %v608, 0.0
        %vm641 = vcmp.gt.f32.partialorder %v609, 0.0
        %vm642 = vcmp.gt.f32.partialorder %v610, 0.0
        %vm643 = vcmp.gt.f32.partialorder %v611, 0.0
        %vm644 = vcmp.gt.f32.partialorder %v612, 0.0
        %vm645 = vcmp.gt.f32.partialorder %v613, 0.0
        %vm646 = vcmp.gt.f32.partialorder %v614, 0.0
        %v647 = vsub.f32 0.0, %v599
        %v648 = vsub.f32 0.0, %v600
        %v649 = vsub.f32 0.0, %v601
        %v650 = vsub.f32 0.0, %v602
        %v651 = vsub.f32 0.0, %v603
        %v652 = vsub.f32 0.0, %v604
        %v653 = vsub.f32 0.0, %v605
        %v654 = vsub.f32 0.0, %v606
        %v655 = vsub.f32 0.0, %v607
        %v656 = vsub.f32 0.0, %v608
        %v657 = vsub.f32 0.0, %v609
        %v658 = vsub.f32 0.0, %v610
        %v659 = vsub.f32 0.0, %v611
        %v660 = vsub.f32 0.0, %v612
        %v661 = vsub.f32 0.0, %v613
        %v662 = vsub.f32 0.0, %v614
        %v663 = vmul.f32 %v647, 1.442695
        %v664 = vpow.pop %v663
        %v665 = vmul.f32 %v648, 1.442695
        %v666 = vpow.pop %v665
        %v667 = vmul.f32 %v649, 1.442695
        %v668 = vpow.pop %v667
        %v669 = vmul.f32 %v650, 1.442695
        %v670 = vpow.pop %v669
        %v671 = vmul.f32 %v651, 1.442695
        %v672 = vpow.pop %v671
        %v673 = vmul.f32 %v652, 1.442695
        %v674 = vpow.pop %v673
        %v675 = vmul.f32 %v653, 1.442695
        %v676 = vpow.pop %v675
        %v677 = vmul.f32 %v654, 1.442695
        %v678 = vpow.pop %v677
        %v679 = vmul.f32 %v655, 1.442695
        %v680 = vpow.pop %v679
        %v681 = vmul.f32 %v656, 1.442695
        %v682 = vpow.pop %v681
        %v683 = vmul.f32 %v657, 1.442695
        %v684 = vpow.pop %v683
        %v685 = vmul.f32 %v658, 1.442695
        %v686 = vpow.pop %v685
        %v687 = vmul.f32 %v659, 1.442695
        %v688 = vpow.pop %v687
        %v689 = vmul.f32 %v660, 1.442695
        %v690 = vpow.pop %v689
        %v691 = vmul.f32 %v661, 1.442695
        %v692 = vpow.pop %v691
        %v693 = vmul.f32 %v662, 1.442695
        %v694 = vpow.pop %v693
        %v695 = vadd.f32 %v664, 1.0
        %v696 = vlog2.pop %v695
        %v697 = vmul.f32 %v696, 0.6931472
        %v698 = vmul.f32 -0.5, %v664
        %v699 = vadd.f32 %v698, 1.0
        %v700 = vmul.f32 %v699, %v664
        %v701 = vand.u32 2147483647, %v664
        %vm702 = vcmp.lt.f32.partialorder %v701, 0.0004427343
        %v703 = vsel %vm702, %v700, %v697
        %v704 = vadd.f32 %v666, 1.0
        %v705 = vlog2.pop %v704
        %v706 = vmul.f32 %v705, 0.6931472
        %v707 = vmul.f32 -0.5, %v666
        %v708 = vadd.f32 %v707, 1.0
        %v709 = vmul.f32 %v708, %v666
        %v710 = vand.u32 2147483647, %v666
        %vm711 = vcmp.lt.f32.partialorder %v710, 0.0004427343
        %v712 = vsel %vm711, %v709, %v706
        %v713 = vadd.f32 %v668, 1.0
        %v714 = vlog2.pop %v713
        %v715 = vmul.f32 %v714, 0.6931472
        %v716 = vmul.f32 -0.5, %v668
        %v717 = vadd.f32 %v716, 1.0
        %v718 = vmul.f32 %v717, %v668
        %v719 = vand.u32 2147483647, %v668
        %vm720 = vcmp.lt.f32.partialorder %v719, 0.0004427343
        %v721 = vsel %vm720, %v718, %v715
        %v722 = vadd.f32 %v670, 1.0
        %v723 = vlog2.pop %v722
        %v724 = vmul.f32 %v723, 0.6931472
        %v725 = vmul.f32 -0.5, %v670
        %v726 = vadd.f32 %v725, 1.0
        %v727 = vmul.f32 %v726, %v670
        %v728 = vand.u32 2147483647, %v670
        %vm729 = vcmp.lt.f32.partialorder %v728, 0.0004427343
        %v730 = vsel %vm729, %v727, %v724
        %v731 = vadd.f32 %v672, 1.0
        %v732 = vlog2.pop %v731
        %v733 = vmul.f32 %v732, 0.6931472
        %v734 = vmul.f32 -0.5, %v672
        %v735 = vadd.f32 %v734, 1.0
        %v736 = vmul.f32 %v735, %v672
        %v737 = vand.u32 2147483647, %v672
        %vm738 = vcmp.lt.f32.partialorder %v737, 0.0004427343
        %v739 = vsel %vm738, %v736, %v733
        %v740 = vadd.f32 %v674, 1.0
        %v741 = vlog2.pop %v740
        %v742 = vmul.f32 %v741, 0.6931472
        %v743 = vmul.f32 -0.5, %v674
        %v744 = vadd.f32 %v743, 1.0
        %v745 = vmul.f32 %v744, %v674
        %v746 = vand.u32 2147483647, %v674
        %vm747 = vcmp.lt.f32.partialorder %v746, 0.0004427343
        %v748 = vsel %vm747, %v745, %v742
        %v749 = vadd.f32 %v676, 1.0
        %v750 = vlog2.pop %v749
        %v751 = vmul.f32 %v750, 0.6931472
        %v752 = vmul.f32 -0.5, %v676
        %v753 = vadd.f32 %v752, 1.0
        %v754 = vmul.f32 %v753, %v676
        %v755 = vand.u32 2147483647, %v676
        %vm756 = vcmp.lt.f32.partialorder %v755, 0.0004427343
        %v757 = vsel %vm756, %v754, %v751
        %v758 = vadd.f32 %v678, 1.0
        %v759 = vlog2.pop %v758
        %v760 = vmul.f32 %v759, 0.6931472
        %v761 = vmul.f32 -0.5, %v678
        %v762 = vadd.f32 %v761, 1.0
        %v763 = vmul.f32 %v762, %v678
        %v764 = vand.u32 2147483647, %v678
        %vm765 = vcmp.lt.f32.partialorder %v764, 0.0004427343
        %v766 = vsel %vm765, %v763, %v760
        %v767 = vadd.f32 %v680, 1.0
        %v768 = vlog2.pop %v767
        %v769 = vmul.f32 %v768, 0.6931472
        %v770 = vmul.f32 -0.5, %v680
        %v771 = vadd.f32 %v770, 1.0
        %v772 = vmul.f32 %v771, %v680
        %v773 = vand.u32 2147483647, %v680
        %vm774 = vcmp.lt.f32.partialorder %v773, 0.0004427343
        %v775 = vsel %vm774, %v772, %v769
        %v776 = vadd.f32 %v682, 1.0
        %v777 = vlog2.pop %v776
        %v778 = vmul.f32 %v777, 0.6931472
        %v779 = vmul.f32 -0.5, %v682
        %v780 = vadd.f32 %v779, 1.0
        %v781 = vmul.f32 %v780, %v682
        %v782 = vand.u32 2147483647, %v682
        %vm783 = vcmp.lt.f32.partialorder %v782, 0.0004427343
        %v784 = vsel %vm783, %v781, %v778
        %v785 = vadd.f32 %v684, 1.0
        %v786 = vlog2.pop %v785
        %v787 = vmul.f32 %v786, 0.6931472
        %v788 = vmul.f32 -0.5, %v684
        %v789 = vadd.f32 %v788, 1.0
        %v790 = vmul.f32 %v789, %v684
        %v791 = vand.u32 2147483647, %v684
        %vm792 = vcmp.lt.f32.partialorder %v791, 0.0004427343
        %v793 = vsel %vm792, %v790, %v787
        %v794 = vadd.f32 %v686, 1.0
        %v795 = vlog2.pop %v794
        %v796 = vmul.f32 %v795, 0.6931472
        %v797 = vmul.f32 -0.5, %v686
        %v798 = vadd.f32 %v797, 1.0
        %v799 = vmul.f32 %v798, %v686
        %v800 = vand.u32 2147483647, %v686
        %vm801 = vcmp.lt.f32.partialorder %v800, 0.0004427343
        %v802 = vsel %vm801, %v799, %v796
        %v803 = vadd.f32 %v688, 1.0
        %v804 = vlog2.pop %v803
        %v805 = vmul.f32 %v804, 0.6931472
        %v806 = vmul.f32 -0.5, %v688
        %v807 = vadd.f32 %v806, 1.0
        %v808 = vmul.f32 %v807, %v688
        %v809 = vand.u32 2147483647, %v688
        %vm810 = vcmp.lt.f32.partialorder %v809, 0.0004427343
        %v811 = vsel %vm810, %v808, %v805
        %v812 = vadd.f32 %v690, 1.0
        %v813 = vlog2.pop %v812
        %v814 = vmul.f32 %v813, 0.6931472
        %v815 = vmul.f32 -0.5, %v690
        %v816 = vadd.f32 %v815, 1.0
        %v817 = vmul.f32 %v816, %v690
        %v818 = vand.u32 2147483647, %v690
        %vm819 = vcmp.lt.f32.partialorder %v818, 0.0004427343
        %v820 = vsel %vm819, %v817, %v814
        %v821 = vadd.f32 %v692, 1.0
        %v822 = vlog2.pop %v821
        %v823 = vmul.f32 %v822, 0.6931472
        %v824 = vmul.f32 -0.5, %v692
        %v825 = vadd.f32 %v824, 1.0
        %v826 = vmul.f32 %v825, %v692
        %v827 = vand.u32 2147483647, %v692
        %vm828 = vcmp.lt.f32.partialorder %v827, 0.0004427343
        %v829 = vsel %vm828, %v826, %v823
        %v830 = vadd.f32 %v694, 1.0
        %v831 = vlog2.pop %v830
        %v832 = vmul.f32 %v831, 0.6931472
        %v833 = vmul.f32 -0.5, %v694
        %v834 = vadd.f32 %v833, 1.0
        %v835 = vmul.f32 %v834, %v694
        %v836 = vand.u32 2147483647, %v694
        %vm837 = vcmp.lt.f32.partialorder %v836, 0.0004427343
        %v838 = vsel %vm837, %v835, %v832
        %v839 = vadd.f32 %v599, %v703
        %v840 = vadd.f32 %v600, %v712
        %v841 = vadd.f32 %v601, %v721
        %v842 = vadd.f32 %v602, %v730
        %v843 = vadd.f32 %v603, %v739
        %v844 = vadd.f32 %v604, %v748
        %v845 = vadd.f32 %v605, %v757
        %v846 = vadd.f32 %v606, %v766
        %v847 = vadd.f32 %v607, %v775
        %v848 = vadd.f32 %v608, %v784
        %v849 = vadd.f32 %v609, %v793
        %v850 = vadd.f32 %v610, %v802
        %v851 = vadd.f32 %v611, %v811
        %v852 = vadd.f32 %v612, %v820
        %v853 = vadd.f32 %v613, %v829
        %v854 = vadd.f32 %v614, %v838
        %v855 = vmul.f32 %v599, 1.442695
        %v856 = vpow.pop %v855
        %v857 = vmul.f32 %v600, 1.442695
        %v858 = vpow.pop %v857
        %v859 = vmul.f32 %v601, 1.442695
        %v860 = vpow.pop %v859
        %v861 = vmul.f32 %v602, 1.442695
        %v862 = vpow.pop %v861
        %v863 = vmul.f32 %v603, 1.442695
        %v864 = vpow.pop %v863
        %v865 = vmul.f32 %v604, 1.442695
        %v866 = vpow.pop %v865
        %v867 = vmul.f32 %v605, 1.442695
        %v868 = vpow.pop %v867
        %v869 = vmul.f32 %v606, 1.442695
        %v870 = vpow.pop %v869
        %v871 = vmul.f32 %v607, 1.442695
        %v872 = vpow.pop %v871
        %v873 = vmul.f32 %v608, 1.442695
        %v874 = vpow.pop %v873
        %v875 = vmul.f32 %v609, 1.442695
        %v876 = vpow.pop %v875
        %v877 = vmul.f32 %v610, 1.442695
        %v878 = vpow.pop %v877
        %v879 = vmul.f32 %v611, 1.442695
        %v880 = vpow.pop %v879
        %v881 = vmul.f32 %v612, 1.442695
        %v882 = vpow.pop %v881
        %v883 = vmul.f32 %v613, 1.442695
        %v884 = vpow.pop %v883
        %v885 = vmul.f32 %v614, 1.442695
        %v886 = vpow.pop %v885
        %v887 = vadd.f32 %v856, 1.0
        %v888 = vlog2.pop %v887
        %v889 = vmul.f32 %v888, 0.6931472
        %v890 = vmul.f32 -0.5, %v856
        %v891 = vadd.f32 %v890, 1.0
        %v892 = vmul.f32 %v891, %v856
        %v893 = vand.u32 2147483647, %v856
        %vm894 = vcmp.lt.f32.partialorder %v893, 0.0004427343
        %v895 = vsel %vm894, %v892, %v889
        %v896 = vadd.f32 %v858, 1.0
        %v897 = vlog2.pop %v896
        %v898 = vmul.f32 %v897, 0.6931472
        %v899 = vmul.f32 -0.5, %v858
        %v900 = vadd.f32 %v899, 1.0
        %v901 = vmul.f32 %v900, %v858
        %v902 = vand.u32 2147483647, %v858
        %vm903 = vcmp.lt.f32.partialorder %v902, 0.0004427343
        %v904 = vsel %vm903, %v901, %v898
        %v905 = vadd.f32 %v860, 1.0
        %v906 = vlog2.pop %v905
        %v907 = vmul.f32 %v906, 0.6931472
        %v908 = vmul.f32 -0.5, %v860
        %v909 = vadd.f32 %v908, 1.0
        %v910 = vmul.f32 %v909, %v860
        %v911 = vand.u32 2147483647, %v860
        %vm912 = vcmp.lt.f32.partialorder %v911, 0.0004427343
        %v913 = vsel %vm912, %v910, %v907
        %v914 = vadd.f32 %v862, 1.0
        %v915 = vlog2.pop %v914
        %v916 = vmul.f32 %v915, 0.6931472
        %v917 = vmul.f32 -0.5, %v862
        %v918 = vadd.f32 %v917, 1.0
        %v919 = vmul.f32 %v918, %v862
        %v920 = vand.u32 2147483647, %v862
        %vm921 = vcmp.lt.f32.partialorder %v920, 0.0004427343
        %v922 = vsel %vm921, %v919, %v916
        %v923 = vadd.f32 %v864, 1.0
        %v924 = vlog2.pop %v923
        %v925 = vmul.f32 %v924, 0.6931472
        %v926 = vmul.f32 -0.5, %v864
        %v927 = vadd.f32 %v926, 1.0
        %v928 = vmul.f32 %v927, %v864
        %v929 = vand.u32 2147483647, %v864
        %vm930 = vcmp.lt.f32.partialorder %v929, 0.0004427343
        %v931 = vsel %vm930, %v928, %v925
        %v932 = vadd.f32 %v866, 1.0
        %v933 = vlog2.pop %v932
        %v934 = vmul.f32 %v933, 0.6931472
        %v935 = vmul.f32 -0.5, %v866
        %v936 = vadd.f32 %v935, 1.0
        %v937 = vmul.f32 %v936, %v866
        %v938 = vand.u32 2147483647, %v866
        %vm939 = vcmp.lt.f32.partialorder %v938, 0.0004427343
        %v940 = vsel %vm939, %v937, %v934
        %v941 = vadd.f32 %v868, 1.0
        %v942 = vlog2.pop %v941
        %v943 = vmul.f32 %v942, 0.6931472
        %v944 = vmul.f32 -0.5, %v868
        %v945 = vadd.f32 %v944, 1.0
        %v946 = vmul.f32 %v945, %v868
        %v947 = vand.u32 2147483647, %v868
        %vm948 = vcmp.lt.f32.partialorder %v947, 0.0004427343
        %v949 = vsel %vm948, %v946, %v943
        %v950 = vadd.f32 %v870, 1.0
        %v951 = vlog2.pop %v950
        %v952 = vmul.f32 %v951, 0.6931472
        %v953 = vmul.f32 -0.5, %v870
        %v954 = vadd.f32 %v953, 1.0
        %v955 = vmul.f32 %v954, %v870
        %v956 = vand.u32 2147483647, %v870
        %vm957 = vcmp.lt.f32.partialorder %v956, 0.0004427343
        %v958 = vsel %vm957, %v955, %v952
        %v959 = vadd.f32 %v872, 1.0
        %v960 = vlog2.pop %v959
        %v961 = vmul.f32 %v960, 0.6931472
        %v962 = vmul.f32 -0.5, %v872
        %v963 = vadd.f32 %v962, 1.0
        %v964 = vmul.f32 %v963, %v872
        %v965 = vand.u32 2147483647, %v872
        %vm966 = vcmp.lt.f32.partialorder %v965, 0.0004427343
        %v967 = vsel %vm966, %v964, %v961
        %v968 = vadd.f32 %v874, 1.0
        %v969 = vlog2.pop %v968
        %v970 = vmul.f32 %v969, 0.6931472
        %v971 = vmul.f32 -0.5, %v874
        %v972 = vadd.f32 %v971, 1.0
        %v973 = vmul.f32 %v972, %v874
        %v974 = vand.u32 2147483647, %v874
        %vm975 = vcmp.lt.f32.partialorder %v974, 0.0004427343
        %v976 = vsel %vm975, %v973, %v970
        %v977 = vadd.f32 %v876, 1.0
        %v978 = vlog2.pop %v977
        %v979 = vmul.f32 %v978, 0.6931472
        %v980 = vmul.f32 -0.5, %v876
        %v981 = vadd.f32 %v980, 1.0
        %v982 = vmul.f32 %v981, %v876
        %v983 = vand.u32 2147483647, %v876
        %vm984 = vcmp.lt.f32.partialorder %v983, 0.0004427343
        %v985 = vsel %vm984, %v982, %v979
        %v986 = vadd.f32 %v878, 1.0
        %v987 = vlog2.pop %v986
        %v988 = vmul.f32 %v987, 0.6931472
        %v989 = vmul.f32 -0.5, %v878
        %v990 = vadd.f32 %v989, 1.0
        %v991 = vmul.f32 %v990, %v878
        %v992 = vand.u32 2147483647, %v878
        %vm993 = vcmp.lt.f32.partialorder %v992, 0.0004427343
        %v994 = vsel %vm993, %v991, %v988
        %v995 = vadd.f32 %v880, 1.0
        %v996 = vlog2.pop %v995
        %v997 = vmul.f32 %v996, 0.6931472
        %v998 = vmul.f32 -0.5, %v880
        %v999 = vadd.f32 %v998, 1.0
        %v1000 = vmul.f32 %v999, %v880
        %v1001 = vand.u32 2147483647, %v880
        %vm1002 = vcmp.lt.f32.partialorder %v1001, 0.0004427343
        %v1003 = vsel %vm1002, %v1000, %v997
        %v1004 = vadd.f32 %v882, 1.0
        %v1005 = vlog2.pop %v1004
        %v1006 = vmul.f32 %v1005, 0.6931472
        %v1007 = vmul.f32 -0.5, %v882
        %v1008 = vadd.f32 %v1007, 1.0
        %v1009 = vmul.f32 %v1008, %v882
        %v1010 = vand.u32 2147483647, %v882
        %vm1011 = vcmp.lt.f32.partialorder %v1010, 0.0004427343
        %v1012 = vsel %vm1011, %v1009, %v1006
        %v1013 = vadd.f32 %v884, 1.0
        %v1014 = vlog2.pop %v1013
        %v1015 = vmul.f32 %v1014, 0.6931472
        %v1016 = vmul.f32 -0.5, %v884
        %v1017 = vadd.f32 %v1016, 1.0
        %v1018 = vmul.f32 %v1017, %v884
        %v1019 = vand.u32 2147483647, %v884
        %vm1020 = vcmp.lt.f32.partialorder %v1019, 0.0004427343
        %v1021 = vsel %vm1020, %v1018, %v1015
        %v1022 = vadd.f32 %v886, 1.0
        %v1023 = vlog2.pop %v1022
        %v1024 = vmul.f32 %v1023, 0.6931472
        %v1025 = vmul.f32 -0.5, %v886
        %v1026 = vadd.f32 %v1025, 1.0
        %v1027 = vmul.f32 %v1026, %v886
        %v1028 = vand.u32 2147483647, %v886
        %vm1029 = vcmp.lt.f32.partialorder %v1028, 0.0004427343
        %v1030 = vsel %vm1029, %v1027, %v1024
        %v1031 = vsel %vm631, %v839, %v895
        %v1032 = vsel %vm632, %v840, %v904
        %v1033 = vsel %vm633, %v841, %v913
        %v1034 = vsel %vm634, %v842, %v922
        %v1035 = vsel %vm635, %v843, %v931
        %v1036 = vsel %vm636, %v844, %v940
        %v1037 = vsel %vm637, %v845, %v949
        %v1038 = vsel %vm638, %v846, %v958
        %v1039 = vsel %vm639, %v847, %v967
        %v1040 = vsel %vm640, %v848, %v976
        %v1041 = vsel %vm641, %v849, %v985
        %v1042 = vsel %vm642, %v850, %v994
        %v1043 = vsel %vm643, %v851, %v1003
        %v1044 = vsel %vm644, %v852, %v1012
        %v1045 = vsel %vm645, %v853, %v1021
        %v1046 = vsel %vm646, %v854, %v1030
        %v1047 = vmul.f32 %v1031, %v615
        %v1048 = vmul.f32 %v1032, %v616
        %v1049 = vmul.f32 %v1033, %v617
        %v1050 = vmul.f32 %v1034, %v618
        %v1051 = vmul.f32 %v1035, %v619
        %v1052 = vmul.f32 %v1036, %v620
        %v1053 = vmul.f32 %v1037, %v621
        %v1054 = vmul.f32 %v1038, %v622
        %v1055 = vmul.f32 %v1039, %v623
        %v1056 = vmul.f32 %v1040, %v624
        %v1057 = vmul.f32 %v1041, %v625
        %v1058 = vmul.f32 %v1042, %v626
        %v1059 = vmul.f32 %v1043, %v627
        %v1060 = vmul.f32 %v1044, %v628
        %v1061 = vmul.f32 %v1045, %v629
        %v1062 = vmul.f32 %v1046, %v630
        %v1063 = vadd.f32 %v583, %v1047
        %v1064 = vadd.f32 %v584, %v1048
        %v1065 = vadd.f32 %v585, %v1049
        %v1066 = vadd.f32 %v586, %v1050
        %v1067 = vadd.f32 %v587, %v1051
        %v1068 = vadd.f32 %v588, %v1052
        %v1069 = vadd.f32 %v589, %v1053
        %v1070 = vadd.f32 %v590, %v1054
        %v1071 = vadd.f32 %v591, %v1055
        %v1072 = vadd.f32 %v592, %v1056
        %v1073 = vadd.f32 %v593, %v1057
        %v1074 = vadd.f32 %v594, %v1058
        %v1075 = vadd.f32 %v595, %v1059
        %v1076 = vadd.f32 %v596, %v1060
        %v1077 = vadd.f32 %v597, %v1061
        %v1078 = vadd.f32 %v598, %v1062
        %v1079 = vmul.f32 %v1063, %v1063
        %v1080 = vmul.f32 %v1064, %v1064
        %v1081 = vmul.f32 %v1065, %v1065
        %v1082 = vmul.f32 %v1066, %v1066
        %v1083 = vmul.f32 %v1067, %v1067
        %v1084 = vmul.f32 %v1068, %v1068
        %v1085 = vmul.f32 %v1069, %v1069
        %v1086 = vmul.f32 %v1070, %v1070
        %v1087 = vmul.f32 %v1071, %v1071
        %v1088 = vmul.f32 %v1072, %v1072
        %v1089 = vmul.f32 %v1073, %v1073
        %v1090 = vmul.f32 %v1074, %v1074
        %v1091 = vmul.f32 %v1075, %v1075
        %v1092 = vmul.f32 %v1076, %v1076
        %v1093 = vmul.f32 %v1077, %v1077
        %v1094 = vmul.f32 %v1078, %v1078
        %v1095 = vadd.f32 %v1079, %v1080
        %v1096 = vadd.f32 %v1095, %v1081
        %v1097 = vadd.f32 %v1096, %v1082
        %v1098 = vadd.f32 %v1097, %v1083
        %v1099 = vadd.f32 %v1098, %v1084
        %v1100 = vadd.f32 %v1099, %v1085
        %v1101 = vadd.f32 %v1100, %v1086
        %v1102 = vadd.f32 %v1101, %v1087
        %v1103 = vadd.f32 %v1102, %v1088
        %v1104 = vadd.f32 %v1103, %v1089
        %v1105 = vadd.f32 %v1104, %v1090
        %v1106 = vadd.f32 %v1105, %v1091
        %v1107 = vadd.f32 %v1106, %v1092
        %v1108 = vadd.f32 %v1107, %v1093
        %v1109 = vadd.f32 %v1108, %v1094
        %1110 = vadd.xlane.f32.xlu0 %v1109
        %v1111 = vpop.xlane.xlu0 %1110
        %v1112 = vrot.slane %v1111, 4
        %v1113 = vadd.f32 %v1111, %v1112
        %v1114 = vrot.slane %v1113, 2
        %v1115 = vadd.f32 %v1113, %v1114
        %v1116 = vrot.slane %v1115, 1
        %v1117 = vadd.f32 %v1115, %v1116
        %s1118 = vtos %v1117
        %s1119 = smul.f32 %s1118, -0.5
        %s1120 = ssub.f32 %s1119, 15055.889
        %v1121 = vmul.f32 %v615, %v615
        %v1122 = vmul.f32 %v616, %v616
        %v1123 = vmul.f32 %v617, %v617
        %v1124 = vmul.f32 %v618, %v618
        %v1125 = vmul.f32 %v619, %v619
        %v1126 = vmul.f32 %v620, %v620
        %v1127 = vmul.f32 %v621, %v621
        %v1128 = vmul.f32 %v622, %v622
        %v1129 = vmul.f32 %v623, %v623
        %v1130 = vmul.f32 %v624, %v624
        %v1131 = vmul.f32 %v625, %v625
        %v1132 = vmul.f32 %v626, %v626
        %v1133 = vmul.f32 %v627, %v627
        %v1134 = vmul.f32 %v628, %v628
        %v1135 = vmul.f32 %v629, %v629
        %v1136 = vmul.f32 %v630, %v630
        %v1137 = vadd.f32 %v1121, %v1122
        %v1138 = vadd.f32 %v1137, %v1123
        %v1139 = vadd.f32 %v1138, %v1124
        %v1140 = vadd.f32 %v1139, %v1125
        %v1141 = vadd.f32 %v1140, %v1126
        %v1142 = vadd.f32 %v1141, %v1127
        %v1143 = vadd.f32 %v1142, %v1128
        %v1144 = vadd.f32 %v1143, %v1129
        %v1145 = vadd.f32 %v1144, %v1130
        %v1146 = vadd.f32 %v1145, %v1131
        %v1147 = vadd.f32 %v1146, %v1132
        %v1148 = vadd.f32 %v1147, %v1133
        %v1149 = vadd.f32 %v1148, %v1134
        %v1150 = vadd.f32 %v1149, %v1135
        %v1151 = vadd.f32 %v1150, %v1136
        %1152 = vadd.xlane.f32.xlu0 %v1151
        %v1153 = vpop.xlane.xlu0 %1152
        %v1154 = vrot.slane %v1153, 4
        %v1155 = vadd.f32 %v1153, %v1154
        %v1156 = vrot.slane %v1155, 2
        %v1157 = vadd.f32 %v1155, %v1156
        %v1158 = vrot.slane %v1157, 1
        %v1159 = vadd.f32 %v1157, %v1158
        %s1160 = vtos %v1159
        %s1161 = smul.f32 %s1160, -0.5
        %v1162 = vlog2.pop %v1031
        %v1163 = vmul.f32 %v1162, 0.6931472
        %v1164 = vlog2.pop %v1032
        %v1165 = vmul.f32 %v1164, 0.6931472
        %v1166 = vlog2.pop %v1033
        %v1167 = vmul.f32 %v1166, 0.6931472
        %v1168 = vlog2.pop %v1034
        %v1169 = vmul.f32 %v1168, 0.6931472
        %v1170 = vlog2.pop %v1035
        %v1171 = vmul.f32 %v1170, 0.6931472
        %v1172 = vlog2.pop %v1036
        %v1173 = vmul.f32 %v1172, 0.6931472
        %v1174 = vlog2.pop %v1037
        %v1175 = vmul.f32 %v1174, 0.6931472
        %v1176 = vlog2.pop %v1038
        %v1177 = vmul.f32 %v1176, 0.6931472
        %v1178 = vlog2.pop %v1039
        %v1179 = vmul.f32 %v1178, 0.6931472
        %v1180 = vlog2.pop %v1040
        %v1181 = vmul.f32 %v1180, 0.6931472
        %v1182 = vlog2.pop %v1041
        %v1183 = vmul.f32 %v1182, 0.6931472
        %v1184 = vlog2.pop %v1042
        %v1185 = vmul.f32 %v1184, 0.6931472
        %v1186 = vlog2.pop %v1043
        %v1187 = vmul.f32 %v1186, 0.6931472
        %v1188 = vlog2.pop %v1044
        %v1189 = vmul.f32 %v1188, 0.6931472
        %v1190 = vlog2.pop %v1045
        %v1191 = vmul.f32 %v1190, 0.6931472
        %v1192 = vlog2.pop %v1046
        %v1193 = vmul.f32 %v1192, 0.6931472
        %v1194 = vadd.f32 %v1163, %v1165
        %v1195 = vadd.f32 %v1194, %v1167
        %v1196 = vadd.f32 %v1195, %v1169
        %v1197 = vadd.f32 %v1196, %v1171
        %v1198 = vadd.f32 %v1197, %v1173
        %v1199 = vadd.f32 %v1198, %v1175
        %v1200 = vadd.f32 %v1199, %v1177
        %v1201 = vadd.f32 %v1200, %v1179
        %v1202 = vadd.f32 %v1201, %v1181
        %v1203 = vadd.f32 %v1202, %v1183
        %v1204 = vadd.f32 %v1203, %v1185
        %v1205 = vadd.f32 %v1204, %v1187
        %v1206 = vadd.f32 %v1205, %v1189
        %v1207 = vadd.f32 %v1206, %v1191
        %v1208 = vadd.f32 %v1207, %v1193
        %1209 = vadd.xlane.f32.xlu0 %v1208
        %v1210 = vpop.xlane.xlu0 %1209
        %v1211 = vrot.slane %v1210, 4
        %v1212 = vadd.f32 %v1210, %v1211
        %v1213 = vrot.slane %v1212, 2
        %v1214 = vadd.f32 %v1212, %v1213
        %v1215 = vrot.slane %v1214, 1
        %v1216 = vadd.f32 %v1214, %v1215
        %s1217 = vtos %v1216
        %s1218 = ssub.f32 %s1161, %s1217
        %s1219 = ssub.f32 %s1218, 15055.889
        %v1220 = vld [vmem:[%s578] sm:$0x1]
        %v1221 = vld [vmem:[%s581] sm:$0x1]
        %v1222 = vld [vmem:[%s502] sm:$0x1]
        %vm1223 = vcmp.gt.f32.partialorder %v1221, 0.0
        %v1224 = vsub.f32 0.0, %v1221
        %v1225 = vmul.f32 %v1224, 1.442695
        %v1226 = vpow.pop %v1225
        %v1227 = vadd.f32 %v1226, 1.0
        %v1228 = vlog2.pop %v1227
        %v1229 = vmul.f32 %v1228, 0.6931472
        %v1230 = vmul.f32 -0.5, %v1226
        %v1231 = vadd.f32 %v1230, 1.0
        %v1232 = vmul.f32 %v1231, %v1226
        %v1233 = vand.u32 2147483647, %v1226
        %vm1234 = vcmp.lt.f32.partialorder %v1233, 0.0004427343
        %v1235 = vsel %vm1234, %v1232, %v1229
        %v1236 = vadd.f32 %v1221, %v1235
        %v1237 = vmul.f32 %v1221, 1.442695
        %v1238 = vpow.pop %v1237
        %v1239 = vadd.f32 %v1238, 1.0
        %v1240 = vlog2.pop %v1239
        %v1241 = vmul.f32 %v1240, 0.6931472
        %v1242 = vmul.f32 -0.5, %v1238
        %v1243 = vadd.f32 %v1242, 1.0
        %v1244 = vmul.f32 %v1243, %v1238
        %v1245 = vand.u32 2147483647, %v1238
        %vm1246 = vcmp.lt.f32.partialorder %v1245, 0.0004427343
        %v1247 = vsel %vm1246, %v1244, %v1241
        %v1248 = vsel %vm1223, %v1236, %v1247
        %v1249 = vmul.f32 %v1248, %v1222
        %v1250 = vadd.f32 %v1220, %v1249
        %v1251 = vmul.f32 %v1250, %v1250
        %vm1252 = vcmask 1040384
        %v1253 = vsel %vm1252, %v1251, 0.0
        %1254 = vadd.xlane.f32.xlu0 %v1253
        %v1255 = vpop.xlane.xlu0 %1254
        %v1256 = vrot.slane %v1255, 4
        %v1257 = vadd.f32 %v1255, %v1256
        %v1258 = vrot.slane %v1257, 2
        %v1259 = vadd.f32 %v1257, %v1258
        %v1260 = vrot.slane %v1259, 1
        %v1261 = vadd.f32 %v1259, %v1260
        %s1262 = vtos %v1261
        %s1263 = smul.f32 %s1262, -0.5
        %s1264 = ssub.f32 %s1263, 117.62413
        %v1265 = vmul.f32 %v1222, %v1222
        %v1266 = vsel %vm1252, %v1265, 0.0
        %1267 = vadd.xlane.f32.xlu0 %v1266
        %v1268 = vpop.xlane.xlu0 %1267
        %v1269 = vrot.slane %v1268, 4
        %v1270 = vadd.f32 %v1268, %v1269
        %v1271 = vrot.slane %v1270, 2
        %v1272 = vadd.f32 %v1270, %v1271
        %v1273 = vrot.slane %v1272, 1
        %v1274 = vadd.f32 %v1272, %v1273
        %s1275 = vtos %v1274
        %s1276 = smul.f32 %s1275, -0.5
        %v1277 = vlog2.pop %v1248
        %v1278 = vmul.f32 %v1277, 0.6931472
        %v1279 = vsel %vm1252, %v1278, 0.0
        %1280 = vadd.xlane.f32.xlu0 %v1279
        %v1281 = vpop.xlane.xlu0 %1280
        %v1282 = vrot.slane %v1281, 4
        %v1283 = vadd.f32 %v1281, %v1282
        %v1284 = vrot.slane %v1283, 2
        %v1285 = vadd.f32 %v1283, %v1284
        %v1286 = vrot.slane %v1285, 1
        %v1287 = vadd.f32 %v1285, %v1286
        %s1288 = vtos %v1287
        %s1289 = ssub.f32 %s1276, %s1288
        %s1290 = ssub.f32 %s1289, 117.62413
        %s1291 = scalar_select %p582, %s1264, 0.0
        %s1292 = sadd.f32 %s1120, %s1291
        %s1293 = scalar_select %p582, %s1290, 0.0
        %s1294 = sadd.f32 %s1219, %s1293
        %v1295 = vstv %s1292
        %1296 = vst [vmem:[%s565] sm:$0xff] %v1295
        %v1297 = vstv %s1294
        %1298 = vst [vmem:[%s572] sm:$0xff] %v1297
        // Predicated region
        $region69: #{tpu_custom_call.1} parent=47 // pred_check
          %p1299 = pneg %p582
        $region70: #{tpu_custom_call.1} parent=47 // pred_check_branch
          %1301 = sbr.rel (%p1299) target = $region72
        $region71: #{tpu_custom_call.1} parent=47 // pred_region
          %v1303 = vperm.slane %v1250, 0
          %1305 = vst [vmem:[%s558] sm:$0xff] %v1303
        $region72: #{tpu_custom_call.1} parent=47 // pred_fallthru
          _
        %v1306 = vld [vmem:[%s558] sm:$0xff]
        %v1307 = vld [vmem:[%s463] sm:$0xff]
        %1308 = vmatpush.xpose.msra.mxu0 %v1078
        %1309 = vmatpush.xpose.msra.mxu0 %v1077
        %1310 = vmatpush.xpose.msra.mxu0 %v1076
        %1311 = vmatpush.xpose.msra.mxu0 %v1075
        %1312 = vmatpush.xpose.msra.mxu0 %v1074
        %1313 = vmatpush.xpose.msra.mxu0 %v1073
        %1314 = vmatpush.xpose.msra.mxu0 %v1072
        %1315 = vmatpush.xpose.msra.mxu0 %v1071
        %1316 = vmatpush.xpose.msra.mxu0 %v1070
        %1317 = vmatpush.xpose.msra.mxu0 %v1069
        %1318 = vmatpush.xpose.msra.mxu0 %v1068
        %1319 = vmatpush.xpose.msra.mxu0 %v1067
        %1320 = vmatpush.xpose.msra.mxu0 %v1066
        %1321 = vmatpush.xpose.msra.mxu0 %v1065
        %1322 = vmatpush.xpose.msra.mxu0 %v1064
        %1323 = vmatpush.xpose.msra.mxu0 %v1063
        %1324 = vmatmul.f32.gmra.mxu0 %v1307
        %v1325 = vpop.f32.mrf.mxu0
        %v1326 = vadd.f32 0.0, %v1325
        %1327 = vdwg.mxu0
        %v1328 = vadd.f32 %v1306, %v1326
        %1329 = vst [vmem:[%s558] sm:$0xff] %v1328
        %s1330 = sand.u32 %s244, 1
        %s1331 = scalar_lea.sflag [#allocation4], %s1330
        %s1332 = sand.u32 %s244, 1
        %s1333 = smul.addr %s1332, 8
        %s1334 = scalar_lea.vmem [#allocation11], %s1333
        %s1335 = sand.u32 %s36, 1
        %s1336 = scalar_lea.sflag [#allocation13], %s1335
        %s1337 = sand.u32 %s272, 1
        %s1338 = smul.addr %s1337, 8
        %s1339 = scalar_lea.vmem [#allocation12], %s1338
        %s1340 = sand.u32 %s36, 1
        %s1341 = scalar_lea.sflag [#allocation13], %s1340
        %s1342 = sand.u32 %s300, 1
        %s1343 = smul.addr %s1342, 8
        %s1344 = scalar_lea.vmem [#allocation14], %s1343
        // Predicated region
        $region73: #{tpu_custom_call.1} parent=47 // pred_check
          %p1345 = pneg %p254
        $region74: #{tpu_custom_call.1} parent=47 // pred_check_branch
          %1347 = sbr.rel (%p1345) target = $region76
        $region75: #{tpu_custom_call.1} parent=47 // pred_region
          %1349 = vsyncadd %s1331, 0
          %s1350 = smul.addr %s40, 8
          %s1351 = scalar_lea.hbm %s7, %s1350
          %s1353 = sshll.u32 %s1334, 4
          %s1354 = int_to_ptr.vmem [resolvable:$true] %s1353
          %s1355 = sshll.u32 %s1351, 4
          %s1356 = int_to_ptr.hbm [resolvable:$true] %s1355
          %1358 = dma.vmem_to_hbm [thread:$0]  %s1354, 128, %s1356, %s1331
        $region76: #{tpu_custom_call.1} parent=47 // pred_fallthru
          _
        // Predicated region
        $region77: #{tpu_custom_call.1} parent=47 // pred_check
          %p1359 = pneg %p282
        $region78: #{tpu_custom_call.1} parent=47 // pred_check_branch
          %1361 = sbr.rel (%p1359) target = $region80
        $region79: #{tpu_custom_call.1} parent=47 // pred_region
          %1363 = vsyncadd %s1336, 0
          %s1364 = smul.addr %s40, 2
          %s1365 = sadd.s32 %s41, %s1364
          %s1366 = smul.addr %s1365, 8
          %s1367 = scalar_lea.hbm %s8, %s1366
          %s1369 = sshll.u32 %s1339, 4
          %s1370 = int_to_ptr.vmem [resolvable:$true] %s1369
          %s1371 = sshll.u32 %s1367, 4
          %s1372 = int_to_ptr.hbm [resolvable:$true] %s1371
          %1374 = dma.vmem_to_hbm [thread:$0]  %s1370, 128, %s1372, %s1336
        $region80: #{tpu_custom_call.1} parent=47 // pred_fallthru
          _
        // Predicated region
        $region81: #{tpu_custom_call.1} parent=47 // pred_check
          %p1375 = pneg %p310
        $region82: #{tpu_custom_call.1} parent=47 // pred_check_branch
          %1377 = sbr.rel (%p1375) target = $region84
        $region83: #{tpu_custom_call.1} parent=47 // pred_region
          %1379 = vsyncadd %s1341, 0
          %s1380 = smul.addr %s40, 2
          %s1381 = sadd.s32 %s41, %s1380
          %s1382 = smul.addr %s1381, 8
          %s1383 = scalar_lea.hbm %s9, %s1382
          %s1385 = sshll.u32 %s1344, 4
          %s1386 = int_to_ptr.vmem [resolvable:$true] %s1385
          %s1387 = sshll.u32 %s1383, 4
          %s1388 = int_to_ptr.hbm [resolvable:$true] %s1387
          %1390 = dma.vmem_to_hbm [thread:$0]  %s1386, 128, %s1388, %s1341
        $region84: #{tpu_custom_call.1} parent=47 // pred_fallthru
          _
      $region48: #{tpu_custom_call.1} parent=5 // pred_fallthru
        _
      %p1391 = scmp.le.s32.totalorder 2, %s31
      // Predicated region
      $region85: #{tpu_custom_call.1} parent=5 // pred_check
        %p1392 = pneg %p1391
      $region86: #{tpu_custom_call.1} parent=5 // pred_check_branch
        %1394 = sbr.rel (%p1392) target = $region88
      $region87: #{tpu_custom_call.1} parent=5 // pred_region
        %s1395 = ssub.s32 %s31, 2
        // Predicated region
        $region89: #{tpu_custom_call.1} parent=87 // pred_check
          %p1396 = pneg %p260
        $region90: #{tpu_custom_call.1} parent=87 // pred_check_branch
          %1398 = sbr.rel (%p1396) target = $region92
        $region91: #{tpu_custom_call.1} parent=87 // pred_region
          %s1399 = sand.u32 %s245, 1
          %s1400 = scalar_lea.sflag [#allocation4], %s1399
          %s1401 = sand.u32 %s245, 1
          %s1402 = smul.addr %s1401, 8
          %s1403 = scalar_lea.vmem [#allocation11], %s1402
          %1405 = dma.done %s1400, 128
        $region92: #{tpu_custom_call.1} parent=87 // pred_fallthru
          _
        // Predicated region
        $region93: #{tpu_custom_call.1} parent=87 // pred_check
          %p1406 = pneg %p288
        $region94: #{tpu_custom_call.1} parent=87 // pred_check_branch
          %1408 = sbr.rel (%p1406) target = $region96
        $region95: #{tpu_custom_call.1} parent=87 // pred_region
          %s1409 = sand.u32 %s37, 1
          %s1410 = scalar_lea.sflag [#allocation13], %s1409
          %s1411 = sand.u32 %s273, 1
          %s1412 = smul.addr %s1411, 8
          %s1413 = scalar_lea.vmem [#allocation12], %s1412
          %1415 = dma.done %s1410, 128
        $region96: #{tpu_custom_call.1} parent=87 // pred_fallthru
          _
        // Predicated region
        $region97: #{tpu_custom_call.1} parent=87 // pred_check
          %p1416 = pneg %p316
        $region98: #{tpu_custom_call.1} parent=87 // pred_check_branch
          %1418 = sbr.rel (%p1416) target = $region100
        $region99: #{tpu_custom_call.1} parent=87 // pred_region
          %s1419 = sand.u32 %s37, 1
          %s1420 = scalar_lea.sflag [#allocation13], %s1419
          %s1421 = sand.u32 %s301, 1
          %s1422 = smul.addr %s1421, 8
          %s1423 = scalar_lea.vmem [#allocation14], %s1422
          %1425 = dma.done %s1420, 128
        $region100: #{tpu_custom_call.1} parent=87 // pred_fallthru
          _
      $region88: #{tpu_custom_call.1} parent=5 // pred_fallthru
        _
    $region6: #{tpu_custom_call.1} parent=1 // loop_footer
      %s35 = sadd.s32 1, %s31
    $region7: #{tpu_custom_call.1} parent=1 // loop_footer_branch
      %30 = sbr.rel target = $region3
    $region8: #{tpu_custom_call.1} parent=1 // loop_exit
      _
    %1426 = vsyncpa [#allocation3], 1
    %s1427 = scalar_lea.sflag [#allocation3], 1
    %1428 = vsyncpa %s1427, 1
    %1429 = vsyncpa [#allocation6], 1
    %s1430 = scalar_lea.sflag [#allocation6], 1
    %1431 = vsyncpa %s1430, 1
    %1432 = vsyncpa [#allocation9], 1
    %s1433 = scalar_lea.sflag [#allocation9], 1
    %1434 = vsyncpa %s1433, 1
    %1435 = vsyncpa [#allocation4], 1
    %s1436 = scalar_lea.sflag [#allocation4], 1
    %1437 = vsyncpa %s1436, 1
    %1438 = vsyncpa [#allocation13], 1
    %s1439 = scalar_lea.sflag [#allocation13], 1
    %1440 = vsyncpa %s1439, 1

</llo_original>
